<compile_context>
chip_gen: v6e
topology: v6e:2x2x1
jax: 0.10.0
libtpu: 0.0.40
codegen_flags: <defaults>
</compile_context>

<pallas_src>
import jax
import jax.numpy as jnp
from jax.experimental import pallas as pl
from jax.experimental.pallas import tpu as pltpu

# Model hyperparameters (mirror TCNWeatherPredictor defaults).
IN_CH = 4
IN_CH_PAD = 8              # pad conv input channels to a sublane multiple
NUM_CH = 64
KS = 3
DIL = 2
PAD = 2
SEQ_LEN = 176              # fc1 expects 11264 = 64 * 176 flattened features
FLAT = NUM_CH * SEQ_LEN    # 11264
HID = 128
OUT_SIZE = 4
OUT_WIN = 30
OUT_FEATS = OUT_SIZE * OUT_WIN   # 120
OUT_PAD = 128                    # lane-dense padded fc2 output width
STACK_CH = KS * IN_CH_PAD        # 24: 3 dilation taps stacked on the K dim
TK = 2816                        # fc1 reduction tile (22*128 = 16 channels*176)
NK = FLAT // TK                  # 4 reduction steps


# ----------------------------------------------------------------------------
# Kernels
# ----------------------------------------------------------------------------
def conv_relu_kernel(xs_ref, wst_ref, bc_ref, y_ref):
    # xs_ref: (1, 24, 176) -- one batch element, 3 dilation taps stacked on K
    # wst_ref: (64, 24), bc_ref: (64, 1), y_ref: (1, 64, 176) bf16
    acc = jnp.dot(wst_ref[...], xs_ref[0],
                  preferred_element_type=jnp.float32)          # (64, 176)
    acc = acc + bc_ref[...]
    # TODO(synk): nn.Dropout(p=0.5) is identity at inference; omitted.
    y_ref[0] = jnp.maximum(acc, 0.0).astype(jnp.bfloat16)


def fc_kernel(yf_ref, w1_ref, b1_ref, w2_ref, b2_ref, out_ref, acc_ref):
    # yf_ref: (B, TK) bf16     w1_ref: (TK, HID) bf16   (K-tiled reduction)
    # b1_ref: (1, HID) f32     w2_ref: (HID, OUT_PAD) f32   b2_ref: (1, OUT_PAD)
    # out_ref: (B, OUT_PAD) f32    acc_ref: (B, HID) f32 scratch
    k = pl.program_id(0)

    @pl.when(k == 0)
    def _():
        # Fold the fc1 bias into the accumulator init (no epilogue add).
        acc_ref[...] = jnp.broadcast_to(b1_ref[...], acc_ref.shape)

    acc_ref[...] += jnp.dot(yf_ref[...], w1_ref[...],
                            preferred_element_type=jnp.float32)

    @pl.when(k == pl.num_programs(0) - 1)
    def _():
        out_ref[...] = jnp.dot(acc_ref[...], w2_ref[...],
                               preferred_element_type=jnp.float32) + b2_ref[...]


# ----------------------------------------------------------------------------
# pallas_call wrappers
# ----------------------------------------------------------------------------
def conv_relu(xs, w_stack, bc):
    B = xs.shape[0]
    return pl.pallas_call(
        conv_relu_kernel,
        out_shape=jax.ShapeDtypeStruct((B, NUM_CH, SEQ_LEN), jnp.bfloat16),
        grid=(B,),
        in_specs=[
            pl.BlockSpec((1, STACK_CH, SEQ_LEN), lambda b: (b, 0, 0)),
            pl.BlockSpec((NUM_CH, STACK_CH), lambda b: (0, 0)),
            pl.BlockSpec((NUM_CH, 1), lambda b: (0, 0)),
        ],
        out_specs=pl.BlockSpec((1, NUM_CH, SEQ_LEN), lambda b: (b, 0, 0)),
        compiler_params=pltpu.CompilerParams(
            dimension_semantics=("parallel",)),
    )(xs, w_stack, bc)


def fc_head(yf, w1t, b1, w2t, b2):
    B = yf.shape[0]
    return pl.pallas_call(
        fc_kernel,
        out_shape=jax.ShapeDtypeStruct((B, OUT_PAD), jnp.float32),
        grid=(NK,),
        in_specs=[
            pl.BlockSpec((B, TK), lambda k: (0, k)),        # activations slice
            pl.BlockSpec((TK, HID), lambda k: (k, 0)),      # w1 K-tile (bf16)
            pl.BlockSpec((1, HID), lambda k: (0, 0)),
            pl.BlockSpec((HID, OUT_PAD), lambda k: (0, 0)),
            pl.BlockSpec((1, OUT_PAD), lambda k: (0, 0)),
        ],
        out_specs=pl.BlockSpec((B, OUT_PAD), lambda k: (0, 0)),
        scratch_shapes=[pltpu.VMEM((B, HID), jnp.float32)],
        compiler_params=pltpu.CompilerParams(
            dimension_semantics=("arbitrary",)),
    )(yf, w1t, b1, w2t, b2)


# ----------------------------------------------------------------------------
# Parameter preparation (one-time, OUTSIDE the jitted forward)
# ----------------------------------------------------------------------------
def prepare_params(params):
    w_conv, b_conv, w1, b1, w2, b2 = (
        params[k] for k in ("w_conv", "b_conv", "w1", "b1", "w2", "b2"))
    # Conv weight (C_out, C_in, K) -> stacked (C_out, K*C_in_pad) so the three
    # dilation taps become one K=24 matmul.  Stacked row k*8+c <-> tap k, ch c.
    w_pad = jnp.pad(w_conv, ((0, 0), (0, IN_CH_PAD - IN_CH), (0, 0)))
    w_stack = jnp.transpose(w_pad, (0, 2, 1)).reshape(NUM_CH, STACK_CH)
    return {
        "w_stack": w_stack.astype(jnp.float32),
        "bc": b_conv.reshape(NUM_CH, 1).astype(jnp.float32),
        "w1t": w1.T.astype(jnp.bfloat16),                      # (FLAT, HID)
        "b1": b1.reshape(1, HID).astype(jnp.float32),
        "w2t": jnp.pad(w2.T, ((0, 0), (0, OUT_PAD - OUT_FEATS))
                       ).astype(jnp.float32),                  # (HID, 128)
        "b2": jnp.pad(b2, (0, OUT_PAD - OUT_FEATS)
                      ).reshape(1, OUT_PAD).astype(jnp.float32),
    }


# ----------------------------------------------------------------------------
# Forward pass
# ----------------------------------------------------------------------------
@jax.jit
def tcn_forward(x, prep):
    B = x.shape[0]
    # glue: NLC -> NCW, zero-pad time by PAD, pad channels to 8, stack the 3
    # dilation taps along the contraction dim (cheap XLA copies, all fuse).
    xt = jnp.transpose(x, (0, 2, 1))                               # (B, 4, L)
    xp = jnp.pad(xt, ((0, 0), (0, IN_CH_PAD - IN_CH), (PAD, PAD)))  # (B,8,L+4)
    xs = jnp.concatenate(
        [xp[:, :, DIL * k: DIL * k + SEQ_LEN] for k in range(KS)], axis=1)
    y = conv_relu(xs, prep["w_stack"], prep["bc"])        # (B, 64, 176) bf16
    yf = y.reshape(B, FLAT)                               # contiguous NCW
    out_pad = fc_head(yf, prep["w1t"], prep["b1"], prep["w2t"], prep["b2"])
    return out_pad[:, :OUT_FEATS].reshape(B, OUT_WIN, OUT_SIZE)


# ----------------------------------------------------------------------------
# Test scaffolding
# ----------------------------------------------------------------------------
def init_params(key):
    ks = jax.random.split(key, 6)
    return {
        "w_conv": 0.1 * jax.random.normal(ks[0], (NUM_CH, IN_CH, KS), jnp.float32),
        "b_conv": 0.1 * jax.random.normal(ks[1], (NUM_CH,), jnp.float32),
        "w1": 0.01 * jax.random.normal(ks[2], (HID, FLAT), jnp.float32),
        "b1": 0.01 * jax.random.normal(ks[3], (HID,), jnp.float32),
        "w2": 0.05 * jax.random.normal(ks[4], (OUT_FEATS, HID), jnp.float32),
        "b2": 0.05 * jax.random.normal(ks[5], (OUT_FEATS,), jnp.float32),
    }


def reference(x, params):
    hp = jax.lax.Precision.HIGHEST
    w_conv, b_conv, w1, b1, w2, b2 = (
        params[k] for k in ("w_conv", "b_conv", "w1", "b1", "w2", "b2"))
    B = x.shape[0]
    xt = jnp.transpose(x, (0, 2, 1))
    xp = jnp.pad(xt, ((0, 0), (0, 0), (PAD, PAD)))
    y = jnp.zeros((B, NUM_CH, SEQ_LEN), jnp.float32)
    for k in range(KS):
        y = y + jnp.einsum("oc,bct->bot", w_conv[:, :, k],
                           xp[:, :, DIL * k: DIL * k + SEQ_LEN], precision=hp)
    y = jnp.maximum(y + b_conv[None, :, None], 0.0)
    yf = y.reshape(B, FLAT)
    h1 = jnp.dot(yf, w1.T, precision=hp) + b1
    h2 = jnp.dot(h1, w2.T, precision=hp) + b2
    return h2.reshape(-1, OUT_WIN, OUT_SIZE)


if __name__ == "__main__":
    key = jax.random.PRNGKey(0)
    kx, kp = jax.random.split(key)
    B = 2
    x = jax.random.normal(kx, (B, SEQ_LEN, IN_CH), jnp.float32)
    params = init_params(kp)
    prep = prepare_params(params)          # one-time weight re-layout / bf16 cast

    out = jax.block_until_ready(tcn_forward(x, prep))
    assert out.shape == (B, OUT_WIN, OUT_SIZE), out.shape

    ref = reference(x, params)
    if not jnp.allclose(out, ref, rtol=2e-2, atol=2e-2):
        raise AssertionError("Pallas output mismatch vs reference")

    print("KERNEL_OK")
</pallas_src>

<mosaic_0001>
module attributes {stable_mosaic.version = 11 : i64} {
  func.func @conv_relu_kernel(%arg0: i32, %arg1: memref<1x24x176xf32, #tpu.memory_space<vmem>>, %arg2: memref<64x24xf32, #tpu.memory_space<vmem>>, %arg3: memref<64x1xf32, #tpu.memory_space<vmem>>, %arg4: memref<1x64x176xbf16, #tpu.memory_space<vmem>>) attributes {dimension_semantics = [#tpu.dimension_semantics<parallel>], iteration_bounds = array<i64: 2>, scalar_prefetch = 0 : i64, scratch_operands = 0 : i64, tpu.core_type = #tpu.core_type<tc>, window_params = [{transform_indices = @transform_0, window_bounds = array<i64: 1, 24, 176>}, {pipeline_mode = #tpu.pipeline_mode<synchronous>, transform_indices = @transform_1, window_bounds = array<i64: 64, 24>}, {pipeline_mode = #tpu.pipeline_mode<synchronous>, transform_indices = @transform_2, window_bounds = array<i64: 64, 1>}, {transform_indices = @transform_3, window_bounds = array<i64: 1, 64, 176>}]} {
    %c0 = arith.constant 0 : index
    %c0_0 = arith.constant 0 : index
    %0 = vector.load %arg2[%c0, %c0_0] : memref<64x24xf32, #tpu.memory_space<vmem>>, vector<64x24xf32>
    %c0_1 = arith.constant 0 : index
    %c0_2 = arith.constant 0 : index
    %c0_3 = arith.constant 0 : index
    %1 = vector.load %arg1[%c0_1, %c0_2, %c0_3] : memref<1x24x176xf32, #tpu.memory_space<vmem>>, vector<1x24x176xf32>
    %2 = vector.shape_cast %1 : vector<1x24x176xf32> to vector<24x176xf32>
    %cst = arith.constant dense<0.000000e+00> : vector<64x176xf32>
    %3 = tpu.matmul %0, %2, %cst {dimension_numbers = #tpu.dot_dimension_numbers<[1], [0], [0], [1], [0, 0, 1, 1], [], []>} : vector<64x24xf32>, vector<24x176xf32>, vector<64x176xf32> -> vector<64x176xf32>
    %c0_4 = arith.constant 0 : index
    %c0_5 = arith.constant 0 : index
    %4 = vector.load %arg3[%c0_4, %c0_5] : memref<64x1xf32, #tpu.memory_space<vmem>>, vector<64x1xf32>
    %5 = vector.broadcast %4 : vector<64x1xf32> to vector<64x176xf32>
    %6 = arith.addf %3, %5 : vector<64x176xf32>
    %cst_6 = arith.constant 0.000000e+00 : f32
    %7 = vector.broadcast %cst_6 : f32 to vector<64x176xf32>
    %8 = arith.maximumf %6, %7 : vector<64x176xf32>
    %9 = arith.truncf %8 : vector<64x176xf32> to vector<64x176xbf16>
    %c0_7 = arith.constant 0 : index
    %c0_8 = arith.constant 0 : index
    %c0_9 = arith.constant 0 : index
    %10 = vector.load %arg4[%c0_7, %c0_8, %c0_9] : memref<1x64x176xbf16, #tpu.memory_space<vmem>>, vector<1x64x176xbf16>
    %11 = vector.shape_cast %10 : vector<1x64x176xbf16> to vector<64x176xbf16>
    %12 = vector.shape_cast %9 : vector<64x176xbf16> to vector<1x64x176xbf16>
    tpu.vector_store %arg4[%c0_7, %c0_8, %c0_9], %12 {strides = array<i32>} : memref<1x64x176xbf16, #tpu.memory_space<vmem>>, vector<1x64x176xbf16>,
    return
  }
  func.func @transform_0(%arg0: i32) -> (i32, i32, i32) {
    %c0_i32 = arith.constant 0 : i32
    %c0_i32_0 = arith.constant 0 : i32
    %c0_i32_1 = arith.constant 0 : i32
    return %arg0, %c0_i32, %c0_i32_0 : i32, i32, i32
  }
  func.func @transform_1(%arg0: i32) -> (i32, i32) {
    %c0_i32 = arith.constant 0 : i32
    %c0_i32_0 = arith.constant 0 : i32
    %c0_i32_1 = arith.constant 0 : i32
    return %c0_i32, %c0_i32_0 : i32, i32
  }
  func.func @transform_2(%arg0: i32) -> (i32, i32) {
    %c0_i32 = arith.constant 0 : i32
    %c0_i32_0 = arith.constant 0 : i32
    %c0_i32_1 = arith.constant 0 : i32
    return %c0_i32, %c0_i32_0 : i32, i32
  }
  func.func @transform_3(%arg0: i32) -> (i32, i32, i32) {
    %c0_i32 = arith.constant 0 : i32
    %c0_i32_0 = arith.constant 0 : i32
    %c0_i32_1 = arith.constant 0 : i32
    return %arg0, %c0_i32, %c0_i32_0 : i32, i32, i32
  }
}

module attributes {stable_mosaic.version = 11 : i64} {
  func.func @fc_kernel(%arg0: i32, %arg1: memref<2x2816xbf16, #tpu.memory_space<vmem>>, %arg2: memref<2816x128xbf16, #tpu.memory_space<vmem>>, %arg3: memref<1x128xf32, #tpu.memory_space<vmem>>, %arg4: memref<128x128xf32, #tpu.memory_space<vmem>>, %arg5: memref<1x128xf32, #tpu.memory_space<vmem>>, %arg6: memref<2x128xf32, #tpu.memory_space<vmem>>, %arg7: memref<2x128xf32, #tpu.memory_space<vmem>>) attributes {dimension_semantics = [#tpu.dimension_semantics<arbitrary>], iteration_bounds = array<i64: 4>, scalar_prefetch = 0 : i64, scratch_operands = 1 : i64, tpu.core_type = #tpu.core_type<tc>, window_params = [{transform_indices = @transform_0, window_bounds = array<i64: 2, 2816>}, {transform_indices = @transform_1, window_bounds = array<i64: 2816, 128>}, {pipeline_mode = #tpu.pipeline_mode<synchronous>, transform_indices = @transform_2, window_bounds = array<i64: 1, 128>}, {pipeline_mode = #tpu.pipeline_mode<synchronous>, transform_indices = @transform_3, window_bounds = array<i64: 128, 128>}, {pipeline_mode = #tpu.pipeline_mode<synchronous>, transform_indices = @transform_4, window_bounds = array<i64: 1, 128>}, {pipeline_mode = #tpu.pipeline_mode<synchronous>, transform_indices = @transform_5, window_bounds = array<i64: 2, 128>}]} {
    %c0_i32 = arith.constant 0 : i32
    %0 = arith.cmpi eq, %arg0, %c0_i32 : i32
    %1 = arith.extui %0 : i1 to i32
    %c0_i32_0 = arith.constant 0 : i32
    %2 = arith.cmpi ne, %1, %c0_i32_0 : i32
    scf.if %2 {
      %c0_9 = arith.constant 0 : index
      %c0_10 = arith.constant 0 : index
      %12 = vector.load %arg3[%c0_9, %c0_10] : memref<1x128xf32, #tpu.memory_space<vmem>>, vector<1x128xf32>
      %13 = vector.shape_cast %12 : vector<1x128xf32> to vector<1x128xf32>
      %14 = vector.broadcast %13 : vector<1x128xf32> to vector<2x128xf32>
      %c0_11 = arith.constant 0 : index
      %c0_12 = arith.constant 0 : index
      %15 = vector.load %arg7[%c0_11, %c0_12] : memref<2x128xf32, #tpu.memory_space<vmem>>, vector<2x128xf32>
      tpu.vector_store %arg7[%c0_11, %c0_12], %14 {strides = array<i32>} : memref<2x128xf32, #tpu.memory_space<vmem>>, vector<2x128xf32>,
    } else {
    }
    %c0 = arith.constant 0 : index
    %c0_1 = arith.constant 0 : index
    %3 = vector.load %arg7[%c0, %c0_1] : memref<2x128xf32, #tpu.memory_space<vmem>>, vector<2x128xf32>
    %c0_2 = arith.constant 0 : index
    %c0_3 = arith.constant 0 : index
    %4 = vector.load %arg1[%c0_2, %c0_3] : memref<2x2816xbf16, #tpu.memory_space<vmem>>, vector<2x2816xbf16>
    %c0_4 = arith.constant 0 : index
    %c0_5 = arith.constant 0 : index
    %5 = vector.load %arg2[%c0_4, %c0_5] : memref<2816x128xbf16, #tpu.memory_space<vmem>>, vector<2816x128xbf16>
    %cst = arith.constant dense<0.000000e+00> : vector<2x128xf32>
    %6 = tpu.matmul %4, %5, %cst {dimension_numbers = #tpu.dot_dimension_numbers<[1], [0], [0], [1], [0, 0, 1, 1], [], []>} : vector<2x2816xbf16>, vector<2816x128xbf16>, vector<2x128xf32> -> vector<2x128xf32>
    %7 = arith.addf %3, %6 : vector<2x128xf32>
    %c0_6 = arith.constant 0 : index
    %c0_7 = arith.constant 0 : index
    %8 = vector.load %arg7[%c0_6, %c0_7] : memref<2x128xf32, #tpu.memory_space<vmem>>, vector<2x128xf32>
    tpu.vector_store %arg7[%c0_6, %c0_7], %7 {strides = array<i32>} : memref<2x128xf32, #tpu.memory_space<vmem>>, vector<2x128xf32>,
    %c3_i32 = arith.constant 3 : i32
    %9 = arith.cmpi eq, %arg0, %c3_i32 : i32
    %10 = arith.extui %9 : i1 to i32
    %c0_i32_8 = arith.constant 0 : i32
    %11 = arith.cmpi ne, %10, %c0_i32_8 : i32
    scf.if %11 {
      %c0_9 = arith.constant 0 : index
      %c0_10 = arith.constant 0 : index
      %12 = vector.load %arg7[%c0_9, %c0_10] : memref<2x128xf32, #tpu.memory_space<vmem>>, vector<2x128xf32>
      %c0_11 = arith.constant 0 : index
      %c0_12 = arith.constant 0 : index
      %13 = vector.load %arg4[%c0_11, %c0_12] : memref<128x128xf32, #tpu.memory_space<vmem>>, vector<128x128xf32>
      %cst_13 = arith.constant dense<0.000000e+00> : vector<2x128xf32>
      %14 = tpu.matmul %12, %13, %cst_13 {dimension_numbers = #tpu.dot_dimension_numbers<[1], [0], [0], [1], [0, 0, 1, 1], [], []>} : vector<2x128xf32>, vector<128x128xf32>, vector<2x128xf32> -> vector<2x128xf32>
      %c0_14 = arith.constant 0 : index
      %c0_15 = arith.constant 0 : index
      %15 = vector.load %arg5[%c0_14, %c0_15] : memref<1x128xf32, #tpu.memory_space<vmem>>, vector<1x128xf32>
      %16 = vector.broadcast %15 : vector<1x128xf32> to vector<2x128xf32>
      %17 = arith.addf %14, %16 : vector<2x128xf32>
      %c0_16 = arith.constant 0 : index
      %c0_17 = arith.constant 0 : index
      %18 = vector.load %arg6[%c0_16, %c0_17] : memref<2x128xf32, #tpu.memory_space<vmem>>, vector<2x128xf32>
      tpu.vector_store %arg6[%c0_16, %c0_17], %17 {strides = array<i32>} : memref<2x128xf32, #tpu.memory_space<vmem>>, vector<2x128xf32>,
    } else {
    }
    return
  }
  func.func @transform_0(%arg0: i32) -> (i32, i32) {
    %c0_i32 = arith.constant 0 : i32
    %c0_i32_0 = arith.constant 0 : i32
    return %c0_i32, %arg0 : i32, i32
  }
  func.func @transform_1(%arg0: i32) -> (i32, i32) {
    %c0_i32 = arith.constant 0 : i32
    %c0_i32_0 = arith.constant 0 : i32
    return %arg0, %c0_i32 : i32, i32
  }
  func.func @transform_2(%arg0: i32) -> (i32, i32) {
    %c0_i32 = arith.constant 0 : i32
    %c0_i32_0 = arith.constant 0 : i32
    %c0_i32_1 = arith.constant 0 : i32
    return %c0_i32, %c0_i32_0 : i32, i32
  }
  func.func @transform_3(%arg0: i32) -> (i32, i32) {
    %c0_i32 = arith.constant 0 : i32
    %c0_i32_0 = arith.constant 0 : i32
    %c0_i32_1 = arith.constant 0 : i32
    return %c0_i32, %c0_i32_0 : i32, i32
  }
  func.func @transform_4(%arg0: i32) -> (i32, i32) {
    %c0_i32 = arith.constant 0 : i32
    %c0_i32_0 = arith.constant 0 : i32
    %c0_i32_1 = arith.constant 0 : i32
    return %c0_i32, %c0_i32_0 : i32, i32
  }
  func.func @transform_5(%arg0: i32) -> (i32, i32) {
    %c0_i32 = arith.constant 0 : i32
    %c0_i32_0 = arith.constant 0 : i32
    %c0_i32_1 = arith.constant 0 : i32
    return %c0_i32, %c0_i32_0 : i32, i32
  }
}

</mosaic_0001>

<llo_original>
// kernel: tcn_forward.2
$region0: #{tcn_forward.2}
  #allocation0 [shape = 'u32[]', space=smem, size = 0x4, offset = 0x4, fixed_abs, tag = 'smem constant byte address 0x4 - core index']
  #allocation1 [shape = 'u32[144,128]{1,0:T(1,128)}', space=vmem, size = 0x12000, scoped, tag = 'internal scratch']
  %s0 = inlined_call_operand.vmem [shape: f32[2,24,176], index: 0, kind: input, shape index: {}]
  %s1 = inlined_call_operand.vmem [shape: f32[64,24], index: 1, kind: input, shape index: {}]
  %s2 = inlined_call_operand.vmem [shape: f32[64,1], index: 2, kind: input, shape index: {}]
  %s3 = inlined_call_operand.vmem [shape: bf16[2,64,176], index: 3, kind: output, shape index: {}]
  %s4 = sld [smem:[#allocation0]]
  $region45: #{tcn_forward.2} parent=0
    _
  %s6 = ssub.s32 1, %s4
  %s7 = scalar_select 0, %s6, %s4
  loop: start=0, step=1, limit=4
  $region2: #{tcn_forward.2} parent=0 // loop_pre_header
    _
  $region3: #{tcn_forward.2} parent=0 // loop_header
    %s9 = sphi 0, %s13
    %p10 = scmp.ge.s32.totalorder %s9, 4
    %s19 = sphi 0, %s21
    %s22 = sphi 0, %s19
    %s23 = sphi 0, %s22
    %s39 = sphi 0, %s23
    %s43 = sphi 0, %s43
    %s45 = sphi 0, %s43
    %s46 = sphi 0, %s45
    %s60 = sphi 0, %s46
    %s64 = sphi 0, %s64
    %s66 = sphi 0, %s64
    %s67 = sphi 0, %s66
    %s81 = sphi 0, %s67
    %s87 = sphi 0, %s89
    %s90 = sphi 0, %s87
    %s91 = sphi 0, %s90
    %s107 = sphi 0, %s91
  $region4: #{tcn_forward.2} parent=0 // loop_header_branch
    %12 = sbr.rel (%p10) target = $region8
  $region5: #{tcn_forward.2} parent=0 // loop_body
    %s14 = ssub.s32 %s9, 1
    %s15 = ssub.s32 %s9, 2
    %s16 = sadd.s32 %s9, 1
    %s17 = ssub.s32 %s9, %s16
    %p18 = scmp.eq.s32.totalorder %s17, 0
    %s20 = sadd.s32 %s19, 1
    %s21 = scalar_select %p18, %s19, %s20
    %p24 = pneg %p18
    %p25 = scmp.eq.s32.totalorder %s9, 1
    %p26 = por %p24, %p25
    %p27 = scmp.ne.s32.totalorder %s19, %s22
    %p28 = scmp.eq.s32.totalorder %s9, 0
    %p29 = por %p27, %p28
    %p30 = scmp.ne.s32.totalorder %s19, %s22
    %p31 = scmp.eq.s32.totalorder %s14, 1
    %p32 = por %p30, %p31
    %p33 = scmp.ne.s32.totalorder %s22, %s23
    %p34 = scmp.eq.s32.totalorder %s14, 0
    %p35 = por %p33, %p34
    %p36 = scmp.ne.s32.totalorder %s22, %s23
    %p37 = scmp.eq.s32.totalorder %s15, 1
    %p38 = por %p36, %p37
    %p40 = scmp.ne.s32.totalorder %s23, %s39
    %p41 = scmp.eq.s32.totalorder %s15, 0
    %p42 = por %p40, %p41
    %s44 = sadd.s32 %s43, 1
    %p47 = scmp.eq.s32.totalorder %s9, 1
    %p48 = scmp.ne.s32.totalorder %s43, %s45
    %p49 = scmp.eq.s32.totalorder %s9, 0
    %p50 = por %p48, %p49
    %p51 = scmp.ne.s32.totalorder %s43, %s45
    %p52 = scmp.eq.s32.totalorder %s14, 1
    %p53 = por %p51, %p52
    %p54 = scmp.ne.s32.totalorder %s45, %s46
    %p55 = scmp.eq.s32.totalorder %s14, 0
    %p56 = por %p54, %p55
    %p57 = scmp.ne.s32.totalorder %s45, %s46
    %p58 = scmp.eq.s32.totalorder %s15, 1
    %p59 = por %p57, %p58
    %p61 = scmp.ne.s32.totalorder %s46, %s60
    %p62 = scmp.eq.s32.totalorder %s15, 0
    %p63 = por %p61, %p62
    %s65 = sadd.s32 %s64, 1
    %p68 = scmp.eq.s32.totalorder %s9, 1
    %p69 = scmp.ne.s32.totalorder %s64, %s66
    %p70 = scmp.eq.s32.totalorder %s9, 0
    %p71 = por %p69, %p70
    %p72 = scmp.ne.s32.totalorder %s64, %s66
    %p73 = scmp.eq.s32.totalorder %s14, 1
    %p74 = por %p72, %p73
    %p75 = scmp.ne.s32.totalorder %s66, %s67
    %p76 = scmp.eq.s32.totalorder %s14, 0
    %p77 = por %p75, %p76
    %p78 = scmp.ne.s32.totalorder %s66, %s67
    %p79 = scmp.eq.s32.totalorder %s15, 1
    %p80 = por %p78, %p79
    %p82 = scmp.ne.s32.totalorder %s67, %s81
    %p83 = scmp.eq.s32.totalorder %s15, 0
    %p84 = por %p82, %p83
    %s85 = ssub.s32 %s9, %s16
    %p86 = scmp.eq.s32.totalorder %s85, 0
    %s88 = sadd.s32 %s87, 1
    %s89 = scalar_select %p86, %s87, %s88
    %p92 = pneg %p86
    %p93 = scmp.eq.s32.totalorder %s9, 1
    %p94 = por %p92, %p93
    %p95 = scmp.ne.s32.totalorder %s87, %s90
    %p96 = scmp.eq.s32.totalorder %s9, 0
    %p97 = por %p95, %p96
    %p98 = scmp.ne.s32.totalorder %s87, %s90
    %p99 = scmp.eq.s32.totalorder %s14, 1
    %p100 = por %p98, %p99
    %p101 = scmp.ne.s32.totalorder %s90, %s91
    %p102 = scmp.eq.s32.totalorder %s14, 0
    %p103 = por %p101, %p102
    %p104 = scmp.ne.s32.totalorder %s90, %s91
    %p105 = scmp.eq.s32.totalorder %s15, 1
    %p106 = por %p104, %p105
    %p108 = scmp.ne.s32.totalorder %s91, %s107
    %p109 = scmp.eq.s32.totalorder %s15, 0
    %p110 = por %p108, %p109
    %p111 = scmp.le.s32.totalorder 1, %s9
    %p112 = scmp.lt.s32.totalorder %s9, 3
    %p113 = pnand %p111, %p112
    %p114 = pneg %p113
    // Predicated region
    $region9: #{tcn_forward.2} parent=5 // pred_check
      _
    $region10: #{tcn_forward.2} parent=5 // pred_check_branch
      %116 = sbr.rel (%p113) target = $region12
    $region11: #{tcn_forward.2} parent=5 // pred_region
      %s117 = ssub.s32 %s9, 1
      // Predicated region
      $region13: #{tcn_forward.2} parent=11 // pred_check
        %p118 = pneg %p56
      $region14: #{tcn_forward.2} parent=11 // pred_check_branch
        %120 = sbr.rel (%p118) target = $region16
      $region15: #{tcn_forward.2} parent=11 // pred_region
        _
      $region16: #{tcn_forward.2} parent=11 // pred_fallthru
        _
      // Predicated region
      $region17: #{tcn_forward.2} parent=11 // pred_check
        %p121 = pneg %p77
      $region18: #{tcn_forward.2} parent=11 // pred_check_branch
        %123 = sbr.rel (%p121) target = $region20
      $region19: #{tcn_forward.2} parent=11 // pred_region
        _
      $region20: #{tcn_forward.2} parent=11 // pred_fallthru
        _
    $region12: #{tcn_forward.2} parent=5 // pred_fallthru
      _
    %p124 = scmp.lt.s32.totalorder %s9, 2
    // Predicated region
    $region21: #{tcn_forward.2} parent=5 // pred_check
      %p125 = pneg %p124
    $region22: #{tcn_forward.2} parent=5 // pred_check_branch
      %127 = sbr.rel (%p125) target = $region24
    $region23: #{tcn_forward.2} parent=5 // pred_region
      // Predicated region
      $region25: #{tcn_forward.2} parent=23 // pred_check
        %p128 = pneg %p29
      $region26: #{tcn_forward.2} parent=23 // pred_check_branch
        %130 = sbr.rel (%p128) target = $region28
      $region27: #{tcn_forward.2} parent=23 // pred_region
        %p131 = scmp.lt.s32.totalorder %s9, 1
        %s132 = scalar_select %p131, %s9, 1
        %s133 = smul.addr %s132, 6
        %s134 = smul.addr %s133, 8
        %s135 = scalar_lea.vmem %s0, %s134
      $region28: #{tcn_forward.2} parent=23 // pred_fallthru
        _
    $region24: #{tcn_forward.2} parent=5 // pred_fallthru
      _
    %p136 = scmp.le.s32.totalorder 1, %s9
    %p137 = scmp.lt.s32.totalorder %s9, 3
    %p138 = pnand %p136, %p137
    %p139 = pneg %p138
    // Predicated region
    $region29: #{tcn_forward.2} parent=5 // pred_check
      _
    $region30: #{tcn_forward.2} parent=5 // pred_check_branch
      %141 = sbr.rel (%p138) target = $region32
    $region31: #{tcn_forward.2} parent=5 // pred_region
      %s142 = ssub.s32 %s9, 1
      %p143 = scmp.lt.s32.totalorder %s14, 1
      %s144 = scalar_select %p143, %s14, 1
      %s145 = smul.addr %s144, 6
      %s146 = smul.addr %s145, 8
      %s147 = scalar_lea.vmem %s0, %s146
      %p148 = pneg %p35
      %p149 = pneg %p32
      %p150 = pneg %p56
      %p151 = pneg %p53
      %p152 = pneg %p77
      %p153 = pneg %p74
      %p154 = pneg %p103
      %p155 = pneg %p100
      %p156 = scmp.lt.s32.totalorder %s14, 1
      %s157 = scalar_select %p156, %s14, 1
      %s158 = smul.addr %s157, 16
      %s159 = smul.addr %s158, 4
      %s160 = scalar_lea.vmem %s3, %s159
      %p161 = scmp.lt.s32.totalorder %s14, 1
      %s162 = scalar_select %p161, %s14, 1
      %s163 = smul.addr %s162, 6
      %s164 = smul.addr %s163, 8
      %s165 = scalar_lea.vmem %s0, %s164
      %p166 = scmp.lt.s32.totalorder %s14, 1
      %s167 = scalar_select %p166, %s14, 1
      %s168 = smul.addr %s167, 16
      %s169 = smul.addr %s168, 4
      %s170 = scalar_lea.vmem %s3, %s169
      %v171 = vld [vmem:[%s1] sm:$0xff]
      %v172 = vld [vmem:[%s1 + $0x8] sm:$0xff]
      %v173 = vld [vmem:[%s1 + $0x10] sm:$0xff]
      %v174 = vld [vmem:[%s1 + $0x18] sm:$0xff]
      %v175 = vld [vmem:[%s1 + $0x20] sm:$0xff]
      %v176 = vld [vmem:[%s1 + $0x28] sm:$0xff]
      %v177 = vld [vmem:[%s1 + $0x30] sm:$0xff]
      %v178 = vld [vmem:[%s1 + $0x38] sm:$0xff]
      %v179 = vld [vmem:[%s165] sm:$0xff]
      %v180 = vld [vmem:[%s165 + $0x8] sm:$0xff]
      %v181 = vld [vmem:[%s165 + $0x10] sm:$0xff]
      %v182 = vld [vmem:[%s165 + $0x18] sm:$0xff]
      %v183 = vld [vmem:[%s165 + $0x20] sm:$0xff]
      %v184 = vld [vmem:[%s165 + $0x28] sm:$0xff]
      %v185 = vld [vmem:[%s2] sm:$0xff]
      %v186 = vld [vmem:[%s2 + $0x8] sm:$0xff]
      %v187 = vld [vmem:[%s2 + $0x10] sm:$0xff]
      %v188 = vld [vmem:[%s2 + $0x18] sm:$0xff]
      %v189 = vld [vmem:[%s2 + $0x20] sm:$0xff]
      %v190 = vld [vmem:[%s2 + $0x28] sm:$0xff]
      %v191 = vld [vmem:[%s2 + $0x30] sm:$0xff]
      %v192 = vld [vmem:[%s2 + $0x38] sm:$0xff]
      %194 = vset.pattern.permute.xlu0 0
      %195 = vperm.xlu0 %194, %v185
      %v196 = vpop.permute.xlu0 %195
      %199 = vset.pattern.permute.xlu0 0
      %200 = vperm.xlu0 %199, %v186
      %v201 = vpop.permute.xlu0 %200
      %204 = vset.pattern.permute.xlu0 0
      %205 = vperm.xlu0 %204, %v187
      %v206 = vpop.permute.xlu0 %205
      %209 = vset.pattern.permute.xlu0 0
      %210 = vperm.xlu0 %209, %v188
      %v211 = vpop.permute.xlu0 %210
      %214 = vset.pattern.permute.xlu0 0
      %215 = vperm.xlu0 %214, %v189
      %v216 = vpop.permute.xlu0 %215
      %219 = vset.pattern.permute.xlu0 0
      %220 = vperm.xlu0 %219, %v190
      %v221 = vpop.permute.xlu0 %220
      %224 = vset.pattern.permute.xlu0 0
      %225 = vperm.xlu0 %224, %v191
      %v226 = vpop.permute.xlu0 %225
      %229 = vset.pattern.permute.xlu0 0
      %230 = vperm.xlu0 %229, %v192
      %v231 = vpop.permute.xlu0 %230
      %vm233 = vcmask 195584
      %v235 = vsel %vm233, %v171, 0
      %v238 = vsel %vm233, %v172, 0
      %v241 = vsel %vm233, %v173, 0
      %v244 = vsel %vm233, %v174, 0
      %v247 = vsel %vm233, %v175, 0
      %v250 = vsel %vm233, %v176, 0
      %v253 = vsel %vm233, %v177, 0
      %v256 = vsel %vm233, %v178, 0
      %258 = vmatprep.subr.mxu0 0.0
      %259 = vmatpush1.msra.mxu0 0.0
      %260 = vmatprep.subr.mxu0 0.0
      %261 = vmatpush1.msra.mxu0 0.0
      %262 = vmatprep.subr.mxu0 0.0
      %263 = vmatpush1.msra.mxu0 0.0
      %264 = vmatprep.subr.mxu0 0.0
      %265 = vmatpush1.msra.mxu0 0.0
      %266 = vmatprep.subr.mxu0 0.0
      %267 = vmatpush1.msra.mxu0 0.0
      %268 = vmatprep.subr.mxu0 0.0
      %269 = vmatpush1.msra.mxu0 0.0
      %270 = vmatprep.subr.mxu0 0.0
      %271 = vmatpush1.msra.mxu0 0.0
      %272 = vmatprep.subr.mxu0 0.0
      %273 = vmatpush1.msra.mxu0 0.0
      %274 = vmatprep.subr.mxu0 0.0
      %275 = vmatpush1.msra.mxu0 0.0
      %276 = vmatprep.subr.mxu0 0.0
      %277 = vmatpush1.msra.mxu0 0.0
      %278 = vmatprep.subr.mxu0 0.0
      %279 = vmatpush1.msra.mxu0 0.0
      %280 = vmatprep.subr.mxu0 0.0
      %281 = vmatpush1.msra.mxu0 0.0
      %282 = vmatprep.subr.mxu0 0.0
      %283 = vmatpush1.msra.mxu0 0.0
      %284 = vmatprep.subr.mxu0 %v184
      %285 = vmatpush1.msra.mxu0 %v183
      %286 = vmatprep.subr.mxu0 %v182
      %287 = vmatpush1.msra.mxu0 %v181
      %288 = vmatprep.subr.mxu0 %v180
      %289 = vmatpush1.msra.mxu0 %v179
      %290 = vmatprep.subr.mxu0 0.0
      %291 = vmatpush2.msra.mxu0 0.0
      %292 = vmatprep.subr.mxu0 0.0
      %293 = vmatpush2.msra.mxu0 0.0
      %294 = vmatprep.subr.mxu0 0.0
      %295 = vmatpush2.msra.mxu0 0.0
      %296 = vmatprep.subr.mxu0 0.0
      %297 = vmatpush2.msra.mxu0 0.0
      %298 = vmatprep.subr.mxu0 0.0
      %299 = vmatpush2.msra.mxu0 0.0
      %300 = vmatprep.subr.mxu0 0.0
      %301 = vmatpush2.msra.mxu0 0.0
      %302 = vmatprep.subr.mxu0 0.0
      %303 = vmatpush2.msra.mxu0 0.0
      %304 = vmatprep.subr.mxu0 0.0
      %305 = vmatpush2.msra.mxu0 0.0
      %306 = vmatprep.subr.mxu0 0.0
      %307 = vmatpush2.msra.mxu0 0.0
      %308 = vmatprep.subr.mxu0 0.0
      %309 = vmatpush2.msra.mxu0 0.0
      %310 = vmatprep.subr.mxu0 0.0
      %311 = vmatpush2.msra.mxu0 0.0
      %312 = vmatprep.subr.mxu0 0.0
      %313 = vmatpush2.msra.mxu0 0.0
      %314 = vmatprep.subr.mxu0 0.0
      %315 = vmatpush2.msra.mxu0 0.0
      %316 = vmatprep.subr.mxu0 0.0
      %317 = vmatpush2.msra.mxu0 0.0
      %318 = vmatprep.subr.mxu0 0.0
      %319 = vmatpush2.msra.mxu0 0.0
      %320 = vmatprep.subr.mxu0 0.0
      %321 = vmatpush2.msra.mxu0 0.0
      %322 = vmatprep.mubr.f32.mxu0 0.0
      %323 = vmatmul.mubr.f32.gmra.mxu0 %v235
      %v324 = vpop.f32.mrf.mxu0
      %v325 = vadd.f32 %v196, %v324
      %v326 = vpop.f32.mrf.mxu0
      %v327 = vadd.f32 %v196, %v326
      %328 = vmatprep.mubr.f32.mxu0 0.0
      %329 = vmatmul.mubr.f32.gmra.mxu0 %v238
      %v330 = vpop.f32.mrf.mxu0
      %v331 = vadd.f32 %v201, %v330
      %v332 = vpop.f32.mrf.mxu0
      %v333 = vadd.f32 %v201, %v332
      %334 = vmatprep.mubr.f32.mxu0 0.0
      %335 = vmatmul.mubr.f32.gmra.mxu0 %v241
      %v336 = vpop.f32.mrf.mxu0
      %v337 = vadd.f32 %v206, %v336
      %v338 = vpop.f32.mrf.mxu0
      %v339 = vadd.f32 %v206, %v338
      %340 = vmatprep.mubr.f32.mxu0 0.0
      %341 = vmatmul.mubr.f32.gmra.mxu0 %v244
      %v342 = vpop.f32.mrf.mxu0
      %v343 = vadd.f32 %v211, %v342
      %v344 = vpop.f32.mrf.mxu0
      %v345 = vadd.f32 %v211, %v344
      %346 = vmatprep.mubr.f32.mxu0 0.0
      %347 = vmatmul.mubr.f32.gmra.mxu0 %v247
      %v348 = vpop.f32.mrf.mxu0
      %v349 = vadd.f32 %v216, %v348
      %v350 = vpop.f32.mrf.mxu0
      %v351 = vadd.f32 %v216, %v350
      %352 = vmatprep.mubr.f32.mxu0 0.0
      %353 = vmatmul.mubr.f32.gmra.mxu0 %v250
      %v354 = vpop.f32.mrf.mxu0
      %v355 = vadd.f32 %v221, %v354
      %v356 = vpop.f32.mrf.mxu0
      %v357 = vadd.f32 %v221, %v356
      %358 = vmatprep.mubr.f32.mxu0 0.0
      %359 = vmatmul.mubr.f32.gmra.mxu0 %v253
      %v360 = vpop.f32.mrf.mxu0
      %v361 = vadd.f32 %v226, %v360
      %v362 = vpop.f32.mrf.mxu0
      %v363 = vadd.f32 %v226, %v362
      %364 = vmatprep.mubr.f32.mxu0 0.0
      %365 = vmatmul.mubr.f32.gmra.mxu0 %v256
      %v366 = vpop.f32.mrf.mxu0
      %v367 = vadd.f32 %v231, %v366
      %v368 = vpop.f32.mrf.mxu0
      %v369 = vadd.f32 %v231, %v368
      %370 = vdwg.mxu0
      %v371 = vmax.f32 %v325, 0.0
      %v372 = vmax.f32 %v327, 0.0
      %v373 = vmax.f32 %v331, 0.0
      %v374 = vmax.f32 %v333, 0.0
      %v375 = vmax.f32 %v337, 0.0
      %v376 = vmax.f32 %v339, 0.0
      %v377 = vmax.f32 %v343, 0.0
      %v378 = vmax.f32 %v345, 0.0
      %v379 = vmax.f32 %v349, 0.0
      %v380 = vmax.f32 %v351, 0.0
      %v381 = vmax.f32 %v355, 0.0
      %v382 = vmax.f32 %v357, 0.0
      %v383 = vmax.f32 %v361, 0.0
      %v384 = vmax.f32 %v363, 0.0
      %v385 = vmax.f32 %v367, 0.0
      %v386 = vmax.f32 %v369, 0.0
      %v387 = vpack.c.bf16 %v373, %v371
      %v388 = vpack.c.bf16 %v374, %v372
      %v389 = vpack.c.bf16 %v377, %v375
      %v390 = vpack.c.bf16 %v378, %v376
      %v391 = vpack.c.bf16 %v381, %v379
      %v392 = vpack.c.bf16 %v382, %v380
      %v393 = vpack.c.bf16 %v385, %v383
      %v394 = vpack.c.bf16 %v386, %v384
      %v403 = vunpack.c.l.b16 %v387
      %v404 = vunpack.c.l.b16 %v388
      %v405 = vunpack.c.h.b16 %v387
      %v406 = vunpack.c.h.b16 %v388
      %v407 = vunpack.c.l.b16 %v389
      %v408 = vunpack.c.l.b16 %v390
      %v409 = vunpack.c.h.b16 %v389
      %v410 = vunpack.c.h.b16 %v390
      %v411 = vunpack.c.l.b16 %v391
      %v412 = vunpack.c.l.b16 %v392
      %v413 = vunpack.c.h.b16 %v391
      %v414 = vunpack.c.h.b16 %v392
      %v415 = vunpack.c.l.b16 %v393
      %v416 = vunpack.c.l.b16 %v394
      %v417 = vunpack.c.h.b16 %v393
      %v418 = vunpack.c.h.b16 %v394
      %v419 = vpack.c.b16 %v404, %v403
      %v420 = vpack.c.b16 %v406, %v405
      %v421 = vpack.c.b16 %v408, %v407
      %v422 = vpack.c.b16 %v410, %v409
      %v423 = vpack.c.b16 %v412, %v411
      %v424 = vpack.c.b16 %v414, %v413
      %v425 = vpack.c.b16 %v416, %v415
      %v426 = vpack.c.b16 %v418, %v417
      %vm435 = vcmask 1043456
      %vm436 = vcmask 392196
      %vm437 = vmor %vm436, %vm435
      %438 = vst.msk [vmem:[%s170] sm:$0xff] %vm437, %v419
      %439 = vst.msk [vmem:[%s170 + $0x8] sm:$0xff] %vm437, %v420
      %440 = vst.msk [vmem:[%s170 + $0x10] sm:$0xff] %vm437, %v421
      %441 = vst.msk [vmem:[%s170 + $0x18] sm:$0xff] %vm437, %v422
      %442 = vst.msk [vmem:[%s170 + $0x20] sm:$0xff] %vm437, %v423
      %443 = vst.msk [vmem:[%s170 + $0x28] sm:$0xff] %vm437, %v424
      %444 = vst.msk [vmem:[%s170 + $0x30] sm:$0xff] %vm437, %v425
      %445 = vst.msk [vmem:[%s170 + $0x38] sm:$0xff] %vm437, %v426
      %p446 = scmp.lt.s32.totalorder %s14, 1
      %s447 = scalar_select %p446, %s14, 1
      %s448 = smul.addr %s447, 16
      %s449 = smul.addr %s448, 4
      %s450 = scalar_lea.vmem %s3, %s449
      // Predicated region
      $region33: #{tcn_forward.2} parent=31 // pred_check
        %p451 = pneg %p100
      $region34: #{tcn_forward.2} parent=31 // pred_check_branch
        %453 = sbr.rel (%p451) target = $region36
      $region35: #{tcn_forward.2} parent=31 // pred_region
        _
      $region36: #{tcn_forward.2} parent=31 // pred_fallthru
        _
    $region32: #{tcn_forward.2} parent=5 // pred_fallthru
      _
    %p454 = scmp.le.s32.totalorder 2, %s9
    // Predicated region
    $region37: #{tcn_forward.2} parent=5 // pred_check
      %p455 = pneg %p454
    $region38: #{tcn_forward.2} parent=5 // pred_check_branch
      %457 = sbr.rel (%p455) target = $region40
    $region39: #{tcn_forward.2} parent=5 // pred_region
      %s458 = ssub.s32 %s9, 2
      // Predicated region
      $region41: #{tcn_forward.2} parent=39 // pred_check
        %p459 = pneg %p106
      $region42: #{tcn_forward.2} parent=39 // pred_check_branch
        %461 = sbr.rel (%p459) target = $region44
      $region43: #{tcn_forward.2} parent=39 // pred_region
        %p462 = scmp.lt.s32.totalorder %s15, 1
        %s463 = scalar_select %p462, %s15, 1
        %s464 = smul.addr %s463, 16
        %s465 = smul.addr %s464, 4
        %s466 = scalar_lea.vmem %s3, %s465
      $region44: #{tcn_forward.2} parent=39 // pred_fallthru
        _
    $region40: #{tcn_forward.2} parent=5 // pred_fallthru
      _
  $region6: #{tcn_forward.2} parent=0 // loop_footer
    %s13 = sadd.s32 1, %s9
  $region7: #{tcn_forward.2} parent=0 // loop_footer_branch
    %8 = sbr.rel target = $region3
  $region8: #{tcn_forward.2} parent=0 // loop_exit
    _

// kernel: tcn_forward.3
$region0: #{tcn_forward.3}
  #allocation0 [shape = 'u32[]', space=smem, size = 0x4, offset = 0x4, fixed_abs, tag = 'smem constant byte address 0x4 - core index']
  #allocation1 [shape = 'u32[144,128]{1,0:T(1,128)}', space=vmem, size = 0x12000, scoped, tag = 'internal scratch']
  #allocation2 [shape = 'f32[2,128]{1,0:T(2,128)}', space=vmem, size = 0x400, scoped, tag = 'scratch operand']
  %s0 = inlined_call_operand.vmem [shape: bf16[2,11264], index: 0, kind: input, shape index: {}]
  %s1 = inlined_call_operand.hbm [shape: bf16[11264,128], index: 1, kind: input, shape index: {}]
  %s2 = inlined_call_operand.hbm [shape: f32[1,128], index: 2, kind: input, shape index: {}]
  %s3 = inlined_call_operand.hbm [shape: f32[128,128], index: 3, kind: input, shape index: {}]
  %s4 = inlined_call_operand.hbm [shape: f32[1,128], index: 4, kind: input, shape index: {}]
  %s5 = inlined_call_operand.vmem [shape: f32[2,128], index: 5, kind: output, shape index: {}]
  %s6 = sld [smem:[#allocation0]]
  $region77: #{tcn_forward.3} parent=0
    _
  %s8 = ssub.s32 1, %s6
  %s9 = scalar_select 0, %s8, %s6
  $region1: #{tcn_forward.3} parent=0
    #allocation3 [shape = 'u8[1441792]{0}', space=vmem, size = 0x160000, scoped, tag = 'input window, operand 1']
    #allocation4 [shape = 's32[2]{0}', space=sflag, size = 0x8, scoped, tag = 'scoped memory for tcn_forward.3']
    #allocation5 [shape = 'u8[512]{0}', space=vmem, size = 0x400, scoped, tag = 'input window, operand 2, single buffered']
    #allocation6 [shape = 's32[1]{0}', space=sflag, size = 0x4, scoped, tag = 'scoped memory for tcn_forward.3']
    #allocation7 [shape = 'u8[65536]{0}', space=vmem, size = 0x10000, scoped, tag = 'input window, operand 3, single buffered']
    #allocation8 [shape = 'u8[512]{0}', space=vmem, size = 0x400, scoped, tag = 'input window, operand 4, single buffered']
    #allocation9 [shape = 's32[1]{0}', space=sflag, size = 0x4, scoped, tag = 'scoped memory for tcn_forward.3']
    %10 = vsyncpa [#allocation4], 0
    %s11 = scalar_lea.sflag [#allocation4], 1
    %12 = vsyncpa %s11, 0
    %13 = vsyncpa [#allocation6], 0
    %14 = vsyncpa [#allocation9], 0
    loop: start=0, step=1, limit=6
    $region2: #{tcn_forward.3} parent=1 // loop_pre_header
      _
    $region3: #{tcn_forward.3} parent=1 // loop_header
      %s16 = sphi 0, %s20
      %p17 = scmp.ge.s32.totalorder %s16, 6
      %s26 = sphi 0, %s28
      %s29 = sphi 0, %s26
      %s30 = sphi 0, %s29
      %s46 = sphi 0, %s30
      %s52 = sphi 0, %s54
      %s55 = sphi 0, %s52
      %s56 = sphi 0, %s55
      %s72 = sphi 0, %s56
      %s76 = sphi 0, %s76
      %s78 = sphi 0, %s76
      %s79 = sphi 0, %s78
      %s93 = sphi 0, %s79
      %s97 = sphi 0, %s97
      %s99 = sphi 0, %s97
      %s100 = sphi 0, %s99
      %s114 = sphi 0, %s100
      %s118 = sphi 0, %s118
      %s120 = sphi 0, %s118
      %s121 = sphi 0, %s120
      %s135 = sphi 0, %s121
      %s139 = sphi 0, %s139
      %s141 = sphi 0, %s139
      %s142 = sphi 0, %s141
      %s156 = sphi 0, %s142
    $region4: #{tcn_forward.3} parent=1 // loop_header_branch
      %19 = sbr.rel (%p17) target = $region8
    $region5: #{tcn_forward.3} parent=1 // loop_body
      %s21 = ssub.s32 %s16, 1
      %s22 = ssub.s32 %s16, 2
      %s23 = sadd.s32 %s16, 1
      %s24 = ssub.s32 %s16, %s23
      %p25 = scmp.eq.s32.totalorder %s24, 0
      %s27 = sadd.s32 %s26, 1
      %s28 = scalar_select %p25, %s26, %s27
      %p31 = pneg %p25
      %p32 = scmp.eq.s32.totalorder %s16, 3
      %p33 = por %p31, %p32
      %p34 = scmp.ne.s32.totalorder %s26, %s29
      %p35 = scmp.eq.s32.totalorder %s16, 0
      %p36 = por %p34, %p35
      %p37 = scmp.ne.s32.totalorder %s26, %s29
      %p38 = scmp.eq.s32.totalorder %s21, 3
      %p39 = por %p37, %p38
      %p40 = scmp.ne.s32.totalorder %s29, %s30
      %p41 = scmp.eq.s32.totalorder %s21, 0
      %p42 = por %p40, %p41
      %p43 = scmp.ne.s32.totalorder %s29, %s30
      %p44 = scmp.eq.s32.totalorder %s22, 3
      %p45 = por %p43, %p44
      %p47 = scmp.ne.s32.totalorder %s30, %s46
      %p48 = scmp.eq.s32.totalorder %s22, 0
      %p49 = por %p47, %p48
      %s50 = ssub.s32 %s16, %s23
      %p51 = scmp.eq.s32.totalorder %s50, 0
      %s53 = sadd.s32 %s52, 1
      %s54 = scalar_select %p51, %s52, %s53
      %p57 = pneg %p51
      %p58 = scmp.eq.s32.totalorder %s16, 3
      %p59 = por %p57, %p58
      %p60 = scmp.ne.s32.totalorder %s52, %s55
      %p61 = scmp.eq.s32.totalorder %s16, 0
      %p62 = por %p60, %p61
      %p63 = scmp.ne.s32.totalorder %s52, %s55
      %p64 = scmp.eq.s32.totalorder %s21, 3
      %p65 = por %p63, %p64
      %p66 = scmp.ne.s32.totalorder %s55, %s56
      %p67 = scmp.eq.s32.totalorder %s21, 0
      %p68 = por %p66, %p67
      %p69 = scmp.ne.s32.totalorder %s55, %s56
      %p70 = scmp.eq.s32.totalorder %s22, 3
      %p71 = por %p69, %p70
      %p73 = scmp.ne.s32.totalorder %s56, %s72
      %p74 = scmp.eq.s32.totalorder %s22, 0
      %p75 = por %p73, %p74
      %s77 = sadd.s32 %s76, 1
      %p80 = scmp.eq.s32.totalorder %s16, 3
      %p81 = scmp.ne.s32.totalorder %s76, %s78
      %p82 = scmp.eq.s32.totalorder %s16, 0
      %p83 = por %p81, %p82
      %p84 = scmp.ne.s32.totalorder %s76, %s78
      %p85 = scmp.eq.s32.totalorder %s21, 3
      %p86 = por %p84, %p85
      %p87 = scmp.ne.s32.totalorder %s78, %s79
      %p88 = scmp.eq.s32.totalorder %s21, 0
      %p89 = por %p87, %p88
      %p90 = scmp.ne.s32.totalorder %s78, %s79
      %p91 = scmp.eq.s32.totalorder %s22, 3
      %p92 = por %p90, %p91
      %p94 = scmp.ne.s32.totalorder %s79, %s93
      %p95 = scmp.eq.s32.totalorder %s22, 0
      %p96 = por %p94, %p95
      %s98 = sadd.s32 %s97, 1
      %p101 = scmp.eq.s32.totalorder %s16, 3
      %p102 = scmp.ne.s32.totalorder %s97, %s99
      %p103 = scmp.eq.s32.totalorder %s16, 0
      %p104 = por %p102, %p103
      %p105 = scmp.ne.s32.totalorder %s97, %s99
      %p106 = scmp.eq.s32.totalorder %s21, 3
      %p107 = por %p105, %p106
      %p108 = scmp.ne.s32.totalorder %s99, %s100
      %p109 = scmp.eq.s32.totalorder %s21, 0
      %p110 = por %p108, %p109
      %p111 = scmp.ne.s32.totalorder %s99, %s100
      %p112 = scmp.eq.s32.totalorder %s22, 3
      %p113 = por %p111, %p112
      %p115 = scmp.ne.s32.totalorder %s100, %s114
      %p116 = scmp.eq.s32.totalorder %s22, 0
      %p117 = por %p115, %p116
      %s119 = sadd.s32 %s118, 1
      %p122 = scmp.eq.s32.totalorder %s16, 3
      %p123 = scmp.ne.s32.totalorder %s118, %s120
      %p124 = scmp.eq.s32.totalorder %s16, 0
      %p125 = por %p123, %p124
      %p126 = scmp.ne.s32.totalorder %s118, %s120
      %p127 = scmp.eq.s32.totalorder %s21, 3
      %p128 = por %p126, %p127
      %p129 = scmp.ne.s32.totalorder %s120, %s121
      %p130 = scmp.eq.s32.totalorder %s21, 0
      %p131 = por %p129, %p130
      %p132 = scmp.ne.s32.totalorder %s120, %s121
      %p133 = scmp.eq.s32.totalorder %s22, 3
      %p134 = por %p132, %p133
      %p136 = scmp.ne.s32.totalorder %s121, %s135
      %p137 = scmp.eq.s32.totalorder %s22, 0
      %p138 = por %p136, %p137
      %s140 = sadd.s32 %s139, 1
      %p143 = scmp.eq.s32.totalorder %s16, 3
      %p144 = scmp.ne.s32.totalorder %s139, %s141
      %p145 = scmp.eq.s32.totalorder %s16, 0
      %p146 = por %p144, %p145
      %p147 = scmp.ne.s32.totalorder %s139, %s141
      %p148 = scmp.eq.s32.totalorder %s21, 3
      %p149 = por %p147, %p148
      %p150 = scmp.ne.s32.totalorder %s141, %s142
      %p151 = scmp.eq.s32.totalorder %s21, 0
      %p152 = por %p150, %p151
      %p153 = scmp.ne.s32.totalorder %s141, %s142
      %p154 = scmp.eq.s32.totalorder %s22, 3
      %p155 = por %p153, %p154
      %p157 = scmp.ne.s32.totalorder %s142, %s156
      %p158 = scmp.eq.s32.totalorder %s22, 0
      %p159 = por %p157, %p158
      %p160 = scmp.le.s32.totalorder 1, %s16
      %p161 = scmp.lt.s32.totalorder %s16, 5
      %p162 = pnand %p160, %p161
      %p163 = pneg %p162
      // Predicated region
      $region9: #{tcn_forward.3} parent=5 // pred_check
        _
      $region10: #{tcn_forward.3} parent=5 // pred_check_branch
        %165 = sbr.rel (%p162) target = $region12
      $region11: #{tcn_forward.3} parent=5 // pred_region
        %s166 = ssub.s32 %s16, 1
        // Predicated region
        $region13: #{tcn_forward.3} parent=11 // pred_check
          %p167 = pneg %p89
        $region14: #{tcn_forward.3} parent=11 // pred_check_branch
          %169 = sbr.rel (%p167) target = $region16
        $region15: #{tcn_forward.3} parent=11 // pred_region
          %s171 = ssub.s32 16, 16
          %172 = vsyncadd [#allocation6], %s171
          %s174 = sshll.u32 [#allocation5], 4
          %s175 = int_to_ptr.vmem [resolvable:$true] %s174
          %177 = dma.hbm_to_vmem [thread:$0]  %s2, 16, %s175, [#allocation6]
        $region16: #{tcn_forward.3} parent=11 // pred_fallthru
          _
        // Predicated region
        $region17: #{tcn_forward.3} parent=11 // pred_check
          %p178 = pneg %p110
        $region18: #{tcn_forward.3} parent=11 // pred_check_branch
          %180 = sbr.rel (%p178) target = $region20
        $region19: #{tcn_forward.3} parent=11 // pred_region
          %s182 = ssub.s32 2048, 2048
          %183 = vsyncadd [#allocation6], %s182
          %s184 = sshll.u32 [#allocation7], 4
          %s185 = int_to_ptr.vmem [resolvable:$true] %s184
          %190 = dma.hbm_to_vmem [thread:$0]  %s3, 2048, %s185, [#allocation6], 128, 128, 8
        $region20: #{tcn_forward.3} parent=11 // pred_fallthru
          _
        // Predicated region
        $region21: #{tcn_forward.3} parent=11 // pred_check
          %p191 = pneg %p131
        $region22: #{tcn_forward.3} parent=11 // pred_check_branch
          %193 = sbr.rel (%p191) target = $region24
        $region23: #{tcn_forward.3} parent=11 // pred_region
          %s195 = ssub.s32 16, 16
          %196 = vsyncadd [#allocation9], %s195
          %s198 = sshll.u32 [#allocation8], 4
          %s199 = int_to_ptr.vmem [resolvable:$true] %s198
          %201 = dma.hbm_to_vmem [thread:$0]  %s4, 16, %s199, [#allocation9]
        $region24: #{tcn_forward.3} parent=11 // pred_fallthru
          _
      $region12: #{tcn_forward.3} parent=5 // pred_fallthru
        _
      %p202 = scmp.lt.s32.totalorder %s16, 4
      // Predicated region
      $region25: #{tcn_forward.3} parent=5 // pred_check
        %p203 = pneg %p202
      $region26: #{tcn_forward.3} parent=5 // pred_check_branch
        %205 = sbr.rel (%p203) target = $region28
      $region27: #{tcn_forward.3} parent=5 // pred_region
        // Predicated region
        $region29: #{tcn_forward.3} parent=27 // pred_check
          %p206 = pneg %p36
        $region30: #{tcn_forward.3} parent=27 // pred_check_branch
          %208 = sbr.rel (%p206) target = $region32
        $region31: #{tcn_forward.3} parent=27 // pred_region
          %s209 = smul.u32 22, %s16
          %p210 = scmp.lt.s32.totalorder %s209, 87
          %s211 = scalar_select %p210, %s209, 87
          %s212 = scalar_lea.vmem %s0, %s211
          %s213 = smul.u32 22, %s16
        $region32: #{tcn_forward.3} parent=27 // pred_fallthru
          _
        // Predicated region
        $region33: #{tcn_forward.3} parent=27 // pred_check
          %p214 = pneg %p62
        $region34: #{tcn_forward.3} parent=27 // pred_check_branch
          %216 = sbr.rel (%p214) target = $region36
        $region35: #{tcn_forward.3} parent=27 // pred_region
          %s217 = sand.u32 %s52, 1
          %s218 = scalar_lea.sflag [#allocation4], %s217
          %s219 = sand.u32 %s52, 1
          %s220 = smul.addr %s219, 1408
          %s221 = scalar_lea.vmem [#allocation3], %s220
          %s222 = smul.u32 352, %s16
          %s224 = ssub.s32 22528, 22528
          %225 = vsyncadd %s218, %s224
          %s226 = smul.addr %s222, 64
          %s227 = scalar_lea.hbm %s1, %s226
          %s228 = sshll.u32 %s221, 4
          %s229 = int_to_ptr.vmem [resolvable:$true] %s228
          %234 = dma.hbm_to_vmem [thread:$0]  %s227, 22528, %s229, %s218, 64, 64, 4
        $region36: #{tcn_forward.3} parent=27 // pred_fallthru
          _
      $region28: #{tcn_forward.3} parent=5 // pred_fallthru
        _
      %p235 = scmp.le.s32.totalorder 1, %s16
      %p236 = scmp.lt.s32.totalorder %s16, 5
      %p237 = pnand %p235, %p236
      %p238 = pneg %p237
      // Predicated region
      $region37: #{tcn_forward.3} parent=5 // pred_check
        _
      $region38: #{tcn_forward.3} parent=5 // pred_check_branch
        %240 = sbr.rel (%p237) target = $region40
      $region39: #{tcn_forward.3} parent=5 // pred_region
        %s241 = ssub.s32 %s16, 1
        %s242 = sand.u32 %s55, 1
        %s243 = scalar_lea.sflag [#allocation4], %s242
        %s244 = sand.u32 %s55, 1
        %s245 = smul.addr %s244, 1408
        %s246 = scalar_lea.vmem [#allocation3], %s245
        // Predicated region
        $region41: #{tcn_forward.3} parent=39 // pred_check
          %p247 = pneg %p68
        $region42: #{tcn_forward.3} parent=39 // pred_check_branch
          %249 = sbr.rel (%p247) target = $region44
        $region43: #{tcn_forward.3} parent=39 // pred_region
          %250 = dma.done %s243, 22528
        $region44: #{tcn_forward.3} parent=39 // pred_fallthru
          _
        // Predicated region
        $region45: #{tcn_forward.3} parent=39 // pred_check
          %p251 = pneg %p89
        $region46: #{tcn_forward.3} parent=39 // pred_check_branch
          %253 = sbr.rel (%p251) target = $region48
        $region47: #{tcn_forward.3} parent=39 // pred_region
          %254 = dma.done [#allocation6], 16
        $region48: #{tcn_forward.3} parent=39 // pred_fallthru
          _
        // Predicated region
        $region49: #{tcn_forward.3} parent=39 // pred_check
          %p255 = pneg %p110
        $region50: #{tcn_forward.3} parent=39 // pred_check_branch
          %257 = sbr.rel (%p255) target = $region52
        $region51: #{tcn_forward.3} parent=39 // pred_region
          %258 = dma.done [#allocation6], 2048
        $region52: #{tcn_forward.3} parent=39 // pred_fallthru
          _
        // Predicated region
        $region53: #{tcn_forward.3} parent=39 // pred_check
          %p259 = pneg %p131
        $region54: #{tcn_forward.3} parent=39 // pred_check_branch
          %261 = sbr.rel (%p259) target = $region56
        $region55: #{tcn_forward.3} parent=39 // pred_region
          %262 = dma.done [#allocation9], 16
        $region56: #{tcn_forward.3} parent=39 // pred_fallthru
          _
        %s263 = smul.u32 22, %s21
        %p264 = scmp.lt.s32.totalorder %s263, 87
        %s265 = scalar_select %p264, %s263, 87
        %s266 = scalar_lea.vmem %s0, %s265
        %p267 = pneg %p42
        %p268 = pneg %p39
        %s269 = sand.u32 %s55, 1
        %s270 = scalar_lea.sflag [#allocation4], %s269
        %s271 = sand.u32 %s55, 1
        %s272 = smul.addr %s271, 1408
        %s273 = scalar_lea.vmem [#allocation3], %s272
        %p274 = pneg %p68
        %p275 = pneg %p65
        %p276 = pneg %p89
        %p277 = pneg %p86
        %p278 = pneg %p110
        %p279 = pneg %p107
        %p280 = pneg %p131
        %p281 = pneg %p128
        %p282 = pneg %p152
        %p283 = pneg %p149
        %s284 = smul.u32 22, %s21
        %p285 = scmp.lt.s32.totalorder %s284, 87
        %s286 = scalar_select %p285, %s284, 87
        %s287 = scalar_lea.vmem %s0, %s286
        %s288 = smul.u32 22, %s21
        %s289 = smul.u32 352, %s21
        %p291 = scmp.eq.s32.totalorder %s21, 0
        // Predicated region
        $region57: #{tcn_forward.3} parent=39 // pred_check
          %p292 = pneg %p291
        $region58: #{tcn_forward.3} parent=39 // pred_check_branch
          %294 = sbr.rel (%p292) target = $region60
        $region59: #{tcn_forward.3} parent=39 // pred_region
          %v295 = vld [vmem:[#allocation5] sm:$0x1]
          %v297 = vlaneseq
          %v298 = vshrl.u32 %v297, 7
          %v299 = vsub.s32 0, %v298
          %v300 = vrot.slane %v295, %v299
          %302 = vst [vmem:[#allocation2] sm:$0x3] %v300
        $region60: #{tcn_forward.3} parent=39 // pred_fallthru
          _
        %v303 = vld [vmem:[#allocation2] sm:$0x3]
        %v304 = vld [vmem:[%s287] sm:$0xff]
        %v305 = vld [vmem:[%s287 + $0x8] sm:$0xff]
        %v306 = vld [vmem:[%s287 + $0x10] sm:$0x3f]
        %v307 = vld [vmem:[%s246] sm:$0xf]
        %v308 = vld [vmem:[%s246 + $0x4] sm:$0xf]
        %v309 = vld [vmem:[%s246 + $0x8] sm:$0xf]
        %v310 = vld [vmem:[%s246 + $0xc] sm:$0xf]
        %v311 = vld [vmem:[%s246 + $0x10] sm:$0xf]
        %v312 = vld [vmem:[%s246 + $0x14] sm:$0xf]
        %v313 = vld [vmem:[%s246 + $0x18] sm:$0xf]
        %v314 = vld [vmem:[%s246 + $0x1c] sm:$0xf]
        %v315 = vld [vmem:[%s246 + $0x20] sm:$0xf]
        %v316 = vld [vmem:[%s246 + $0x24] sm:$0xf]
        %v317 = vld [vmem:[%s246 + $0x28] sm:$0xf]
        %v318 = vld [vmem:[%s246 + $0x2c] sm:$0xf]
        %v319 = vld [vmem:[%s246 + $0x30] sm:$0xf]
        %v320 = vld [vmem:[%s246 + $0x34] sm:$0xf]
        %v321 = vld [vmem:[%s246 + $0x38] sm:$0xf]
        %v322 = vld [vmem:[%s246 + $0x3c] sm:$0xf]
        %v323 = vld [vmem:[%s246 + $0x40] sm:$0xf]
        %v324 = vld [vmem:[%s246 + $0x44] sm:$0xf]
        %v325 = vld [vmem:[%s246 + $0x48] sm:$0xf]
        %v326 = vld [vmem:[%s246 + $0x4c] sm:$0xf]
        %v327 = vld [vmem:[%s246 + $0x50] sm:$0xf]
        %v328 = vld [vmem:[%s246 + $0x54] sm:$0xf]
        %v329 = vld [vmem:[%s246 + $0x58] sm:$0xf]
        %v330 = vld [vmem:[%s246 + $0x5c] sm:$0xf]
        %v331 = vld [vmem:[%s246 + $0x60] sm:$0xf]
        %v332 = vld [vmem:[%s246 + $0x64] sm:$0xf]
        %v333 = vld [vmem:[%s246 + $0x68] sm:$0xf]
        %v334 = vld [vmem:[%s246 + $0x6c] sm:$0xf]
        %v335 = vld [vmem:[%s246 + $0x70] sm:$0xf]
        %v336 = vld [vmem:[%s246 + $0x74] sm:$0xf]
        %v337 = vld [vmem:[%s246 + $0x78] sm:$0xf]
        %v338 = vld [vmem:[%s246 + $0x7c] sm:$0xf]
        %v339 = vld [vmem:[%s246 + $0x80] sm:$0xf]
        %v340 = vld [vmem:[%s246 + $0x84] sm:$0xf]
        %v341 = vld [vmem:[%s246 + $0x88] sm:$0xf]
        %v342 = vld [vmem:[%s246 + $0x8c] sm:$0xf]
        %v343 = vld [vmem:[%s246 + $0x90] sm:$0xf]
        %v344 = vld [vmem:[%s246 + $0x94] sm:$0xf]
        %v345 = vld [vmem:[%s246 + $0x98] sm:$0xf]
        %v346 = vld [vmem:[%s246 + $0x9c] sm:$0xf]
        %v347 = vld [vmem:[%s246 + $0xa0] sm:$0xf]
        %v348 = vld [vmem:[%s246 + $0xa4] sm:$0xf]
        %v349 = vld [vmem:[%s246 + $0xa8] sm:$0xf]
        %v350 = vld [vmem:[%s246 + $0xac] sm:$0xf]
        %v351 = vld [vmem:[%s246 + $0xb0] sm:$0xf]
        %v352 = vld [vmem:[%s246 + $0xb4] sm:$0xf]
        %v353 = vld [vmem:[%s246 + $0xb8] sm:$0xf]
        %v354 = vld [vmem:[%s246 + $0xbc] sm:$0xf]
        %v355 = vld [vmem:[%s246 + $0xc0] sm:$0xf]
        %v356 = vld [vmem:[%s246 + $0xc4] sm:$0xf]
        %v357 = vld [vmem:[%s246 + $0xc8] sm:$0xf]
        %v358 = vld [vmem:[%s246 + $0xcc] sm:$0xf]
        %v359 = vld [vmem:[%s246 + $0xd0] sm:$0xf]
        %v360 = vld [vmem:[%s246 + $0xd4] sm:$0xf]
        %v361 = vld [vmem:[%s246 + $0xd8] sm:$0xf]
        %v362 = vld [vmem:[%s246 + $0xdc] sm:$0xf]
        %v363 = vld [vmem:[%s246 + $0xe0] sm:$0xf]
        %v364 = vld [vmem:[%s246 + $0xe4] sm:$0xf]
        %v365 = vld [vmem:[%s246 + $0xe8] sm:$0xf]
        %v366 = vld [vmem:[%s246 + $0xec] sm:$0xf]
        %v367 = vld [vmem:[%s246 + $0xf0] sm:$0xf]
        %v368 = vld [vmem:[%s246 + $0xf4] sm:$0xf]
        %v369 = vld [vmem:[%s246 + $0xf8] sm:$0xf]
        %v370 = vld [vmem:[%s246 + $0xfc] sm:$0xf]
        %v371 = vld [vmem:[%s246 + $0x100] sm:$0xf]
        %v372 = vld [vmem:[%s246 + $0x104] sm:$0xf]
        %v373 = vld [vmem:[%s246 + $0x108] sm:$0xf]
        %v374 = vld [vmem:[%s246 + $0x10c] sm:$0xf]
        %v375 = vld [vmem:[%s246 + $0x110] sm:$0xf]
        %v376 = vld [vmem:[%s246 + $0x114] sm:$0xf]
        %v377 = vld [vmem:[%s246 + $0x118] sm:$0xf]
        %v378 = vld [vmem:[%s246 + $0x11c] sm:$0xf]
        %v379 = vld [vmem:[%s246 + $0x120] sm:$0xf]
        %v380 = vld [vmem:[%s246 + $0x124] sm:$0xf]
        %v381 = vld [vmem:[%s246 + $0x128] sm:$0xf]
        %v382 = vld [vmem:[%s246 + $0x12c] sm:$0xf]
        %v383 = vld [vmem:[%s246 + $0x130] sm:$0xf]
        %v384 = vld [vmem:[%s246 + $0x134] sm:$0xf]
        %v385 = vld [vmem:[%s246 + $0x138] sm:$0xf]
        %v386 = vld [vmem:[%s246 + $0x13c] sm:$0xf]
        %v387 = vld [vmem:[%s246 + $0x140] sm:$0xf]
        %v388 = vld [vmem:[%s246 + $0x144] sm:$0xf]
        %v389 = vld [vmem:[%s246 + $0x148] sm:$0xf]
        %v390 = vld [vmem:[%s246 + $0x14c] sm:$0xf]
        %v391 = vld [vmem:[%s246 + $0x150] sm:$0xf]
        %v392 = vld [vmem:[%s246 + $0x154] sm:$0xf]
        %v393 = vld [vmem:[%s246 + $0x158] sm:$0xf]
        %v394 = vld [vmem:[%s246 + $0x15c] sm:$0xf]
        %v395 = vld [vmem:[%s246 + $0x160] sm:$0xf]
        %v396 = vld [vmem:[%s246 + $0x164] sm:$0xf]
        %v397 = vld [vmem:[%s246 + $0x168] sm:$0xf]
        %v398 = vld [vmem:[%s246 + $0x16c] sm:$0xf]
        %v399 = vld [vmem:[%s246 + $0x170] sm:$0xf]
        %v400 = vld [vmem:[%s246 + $0x174] sm:$0xf]
        %v401 = vld [vmem:[%s246 + $0x178] sm:$0xf]
        %v402 = vld [vmem:[%s246 + $0x17c] sm:$0xf]
        %v403 = vld [vmem:[%s246 + $0x180] sm:$0xf]
        %v404 = vld [vmem:[%s246 + $0x184] sm:$0xf]
        %v405 = vld [vmem:[%s246 + $0x188] sm:$0xf]
        %v406 = vld [vmem:[%s246 + $0x18c] sm:$0xf]
        %v407 = vld [vmem:[%s246 + $0x190] sm:$0xf]
        %v408 = vld [vmem:[%s246 + $0x194] sm:$0xf]
        %v409 = vld [vmem:[%s246 + $0x198] sm:$0xf]
        %v410 = vld [vmem:[%s246 + $0x19c] sm:$0xf]
        %v411 = vld [vmem:[%s246 + $0x1a0] sm:$0xf]
        %v412 = vld [vmem:[%s246 + $0x1a4] sm:$0xf]
        %v413 = vld [vmem:[%s246 + $0x1a8] sm:$0xf]
        %v414 = vld [vmem:[%s246 + $0x1ac] sm:$0xf]
        %v415 = vld [vmem:[%s246 + $0x1b0] sm:$0xf]
        %v416 = vld [vmem:[%s246 + $0x1b4] sm:$0xf]
        %v417 = vld [vmem:[%s246 + $0x1b8] sm:$0xf]
        %v418 = vld [vmem:[%s246 + $0x1bc] sm:$0xf]
        %v419 = vld [vmem:[%s246 + $0x1c0] sm:$0xf]
        %v420 = vld [vmem:[%s246 + $0x1c4] sm:$0xf]
        %v421 = vld [vmem:[%s246 + $0x1c8] sm:$0xf]
        %v422 = vld [vmem:[%s246 + $0x1cc] sm:$0xf]
        %v423 = vld [vmem:[%s246 + $0x1d0] sm:$0xf]
        %v424 = vld [vmem:[%s246 + $0x1d4] sm:$0xf]
        %v425 = vld [vmem:[%s246 + $0x1d8] sm:$0xf]
        %v426 = vld [vmem:[%s246 + $0x1dc] sm:$0xf]
        %v427 = vld [vmem:[%s246 + $0x1e0] sm:$0xf]
        %v428 = vld [vmem:[%s246 + $0x1e4] sm:$0xf]
        %v429 = vld [vmem:[%s246 + $0x1e8] sm:$0xf]
        %v430 = vld [vmem:[%s246 + $0x1ec] sm:$0xf]
        %v431 = vld [vmem:[%s246 + $0x1f0] sm:$0xf]
        %v432 = vld [vmem:[%s246 + $0x1f4] sm:$0xf]
        %v433 = vld [vmem:[%s246 + $0x1f8] sm:$0xf]
        %v434 = vld [vmem:[%s246 + $0x1fc] sm:$0xf]
        %v435 = vld [vmem:[%s246 + $0x200] sm:$0xf]
        %v436 = vld [vmem:[%s246 + $0x204] sm:$0xf]
        %v437 = vld [vmem:[%s246 + $0x208] sm:$0xf]
        %v438 = vld [vmem:[%s246 + $0x20c] sm:$0xf]
        %v439 = vld [vmem:[%s246 + $0x210] sm:$0xf]
        %v440 = vld [vmem:[%s246 + $0x214] sm:$0xf]
        %v441 = vld [vmem:[%s246 + $0x218] sm:$0xf]
        %v442 = vld [vmem:[%s246 + $0x21c] sm:$0xf]
        %v443 = vld [vmem:[%s246 + $0x220] sm:$0xf]
        %v444 = vld [vmem:[%s246 + $0x224] sm:$0xf]
        %v445 = vld [vmem:[%s246 + $0x228] sm:$0xf]
        %v446 = vld [vmem:[%s246 + $0x22c] sm:$0xf]
        %v447 = vld [vmem:[%s246 + $0x230] sm:$0xf]
        %v448 = vld [vmem:[%s246 + $0x234] sm:$0xf]
        %v449 = vld [vmem:[%s246 + $0x238] sm:$0xf]
        %v450 = vld [vmem:[%s246 + $0x23c] sm:$0xf]
        %v451 = vld [vmem:[%s246 + $0x240] sm:$0xf]
        %v452 = vld [vmem:[%s246 + $0x244] sm:$0xf]
        %v453 = vld [vmem:[%s246 + $0x248] sm:$0xf]
        %v454 = vld [vmem:[%s246 + $0x24c] sm:$0xf]
        %v455 = vld [vmem:[%s246 + $0x250] sm:$0xf]
        %v456 = vld [vmem:[%s246 + $0x254] sm:$0xf]
        %v457 = vld [vmem:[%s246 + $0x258] sm:$0xf]
        %v458 = vld [vmem:[%s246 + $0x25c] sm:$0xf]
        %v459 = vld [vmem:[%s246 + $0x260] sm:$0xf]
        %v460 = vld [vmem:[%s246 + $0x264] sm:$0xf]
        %v461 = vld [vmem:[%s246 + $0x268] sm:$0xf]
        %v462 = vld [vmem:[%s246 + $0x26c] sm:$0xf]
        %v463 = vld [vmem:[%s246 + $0x270] sm:$0xf]
        %v464 = vld [vmem:[%s246 + $0x274] sm:$0xf]
        %v465 = vld [vmem:[%s246 + $0x278] sm:$0xf]
        %v466 = vld [vmem:[%s246 + $0x27c] sm:$0xf]
        %v467 = vld [vmem:[%s246 + $0x280] sm:$0xf]
        %v468 = vld [vmem:[%s246 + $0x284] sm:$0xf]
        %v469 = vld [vmem:[%s246 + $0x288] sm:$0xf]
        %v470 = vld [vmem:[%s246 + $0x28c] sm:$0xf]
        %v471 = vld [vmem:[%s246 + $0x290] sm:$0xf]
        %v472 = vld [vmem:[%s246 + $0x294] sm:$0xf]
        %v473 = vld [vmem:[%s246 + $0x298] sm:$0xf]
        %v474 = vld [vmem:[%s246 + $0x29c] sm:$0xf]
        %v475 = vld [vmem:[%s246 + $0x2a0] sm:$0xf]
        %v476 = vld [vmem:[%s246 + $0x2a4] sm:$0xf]
        %v477 = vld [vmem:[%s246 + $0x2a8] sm:$0xf]
        %v478 = vld [vmem:[%s246 + $0x2ac] sm:$0xf]
        %v479 = vld [vmem:[%s246 + $0x2b0] sm:$0xf]
        %v480 = vld [vmem:[%s246 + $0x2b4] sm:$0xf]
        %v481 = vld [vmem:[%s246 + $0x2b8] sm:$0xf]
        %v482 = vld [vmem:[%s246 + $0x2bc] sm:$0xf]
        %v483 = vld [vmem:[%s246 + $0x2c0] sm:$0xf]
        %v484 = vld [vmem:[%s246 + $0x2c4] sm:$0xf]
        %v485 = vld [vmem:[%s246 + $0x2c8] sm:$0xf]
        %v486 = vld [vmem:[%s246 + $0x2cc] sm:$0xf]
        %v487 = vld [vmem:[%s246 + $0x2d0] sm:$0xf]
        %v488 = vld [vmem:[%s246 + $0x2d4] sm:$0xf]
        %v489 = vld [vmem:[%s246 + $0x2d8] sm:$0xf]
        %v490 = vld [vmem:[%s246 + $0x2dc] sm:$0xf]
        %v491 = vld [vmem:[%s246 + $0x2e0] sm:$0xf]
        %v492 = vld [vmem:[%s246 + $0x2e4] sm:$0xf]
        %v493 = vld [vmem:[%s246 + $0x2e8] sm:$0xf]
        %v494 = vld [vmem:[%s246 + $0x2ec] sm:$0xf]
        %v495 = vld [vmem:[%s246 + $0x2f0] sm:$0xf]
        %v496 = vld [vmem:[%s246 + $0x2f4] sm:$0xf]
        %v497 = vld [vmem:[%s246 + $0x2f8] sm:$0xf]
        %v498 = vld [vmem:[%s246 + $0x2fc] sm:$0xf]
        %v499 = vld [vmem:[%s246 + $0x300] sm:$0xf]
        %v500 = vld [vmem:[%s246 + $0x304] sm:$0xf]
        %v501 = vld [vmem:[%s246 + $0x308] sm:$0xf]
        %v502 = vld [vmem:[%s246 + $0x30c] sm:$0xf]
        %v503 = vld [vmem:[%s246 + $0x310] sm:$0xf]
        %v504 = vld [vmem:[%s246 + $0x314] sm:$0xf]
        %v505 = vld [vmem:[%s246 + $0x318] sm:$0xf]
        %v506 = vld [vmem:[%s246 + $0x31c] sm:$0xf]
        %v507 = vld [vmem:[%s246 + $0x320] sm:$0xf]
        %v508 = vld [vmem:[%s246 + $0x324] sm:$0xf]
        %v509 = vld [vmem:[%s246 + $0x328] sm:$0xf]
        %v510 = vld [vmem:[%s246 + $0x32c] sm:$0xf]
        %v511 = vld [vmem:[%s246 + $0x330] sm:$0xf]
        %v512 = vld [vmem:[%s246 + $0x334] sm:$0xf]
        %v513 = vld [vmem:[%s246 + $0x338] sm:$0xf]
        %v514 = vld [vmem:[%s246 + $0x33c] sm:$0xf]
        %v515 = vld [vmem:[%s246 + $0x340] sm:$0xf]
        %v516 = vld [vmem:[%s246 + $0x344] sm:$0xf]
        %v517 = vld [vmem:[%s246 + $0x348] sm:$0xf]
        %v518 = vld [vmem:[%s246 + $0x34c] sm:$0xf]
        %v519 = vld [vmem:[%s246 + $0x350] sm:$0xf]
        %v520 = vld [vmem:[%s246 + $0x354] sm:$0xf]
        %v521 = vld [vmem:[%s246 + $0x358] sm:$0xf]
        %v522 = vld [vmem:[%s246 + $0x35c] sm:$0xf]
        %v523 = vld [vmem:[%s246 + $0x360] sm:$0xf]
        %v524 = vld [vmem:[%s246 + $0x364] sm:$0xf]
        %v525 = vld [vmem:[%s246 + $0x368] sm:$0xf]
        %v526 = vld [vmem:[%s246 + $0x36c] sm:$0xf]
        %v527 = vld [vmem:[%s246 + $0x370] sm:$0xf]
        %v528 = vld [vmem:[%s246 + $0x374] sm:$0xf]
        %v529 = vld [vmem:[%s246 + $0x378] sm:$0xf]
        %v530 = vld [vmem:[%s246 + $0x37c] sm:$0xf]
        %v531 = vld [vmem:[%s246 + $0x380] sm:$0xf]
        %v532 = vld [vmem:[%s246 + $0x384] sm:$0xf]
        %v533 = vld [vmem:[%s246 + $0x388] sm:$0xf]
        %v534 = vld [vmem:[%s246 + $0x38c] sm:$0xf]
        %v535 = vld [vmem:[%s246 + $0x390] sm:$0xf]
        %v536 = vld [vmem:[%s246 + $0x394] sm:$0xf]
        %v537 = vld [vmem:[%s246 + $0x398] sm:$0xf]
        %v538 = vld [vmem:[%s246 + $0x39c] sm:$0xf]
        %v539 = vld [vmem:[%s246 + $0x3a0] sm:$0xf]
        %v540 = vld [vmem:[%s246 + $0x3a4] sm:$0xf]
        %v541 = vld [vmem:[%s246 + $0x3a8] sm:$0xf]
        %v542 = vld [vmem:[%s246 + $0x3ac] sm:$0xf]
        %v543 = vld [vmem:[%s246 + $0x3b0] sm:$0xf]
        %v544 = vld [vmem:[%s246 + $0x3b4] sm:$0xf]
        %v545 = vld [vmem:[%s246 + $0x3b8] sm:$0xf]
        %v546 = vld [vmem:[%s246 + $0x3bc] sm:$0xf]
        %v547 = vld [vmem:[%s246 + $0x3c0] sm:$0xf]
        %v548 = vld [vmem:[%s246 + $0x3c4] sm:$0xf]
        %v549 = vld [vmem:[%s246 + $0x3c8] sm:$0xf]
        %v550 = vld [vmem:[%s246 + $0x3cc] sm:$0xf]
        %v551 = vld [vmem:[%s246 + $0x3d0] sm:$0xf]
        %v552 = vld [vmem:[%s246 + $0x3d4] sm:$0xf]
        %v553 = vld [vmem:[%s246 + $0x3d8] sm:$0xf]
        %v554 = vld [vmem:[%s246 + $0x3dc] sm:$0xf]
        %v555 = vld [vmem:[%s246 + $0x3e0] sm:$0xf]
        %v556 = vld [vmem:[%s246 + $0x3e4] sm:$0xf]
        %v557 = vld [vmem:[%s246 + $0x3e8] sm:$0xf]
        %v558 = vld [vmem:[%s246 + $0x3ec] sm:$0xf]
        %v559 = vld [vmem:[%s246 + $0x3f0] sm:$0xf]
        %v560 = vld [vmem:[%s246 + $0x3f4] sm:$0xf]
        %v561 = vld [vmem:[%s246 + $0x3f8] sm:$0xf]
        %v562 = vld [vmem:[%s246 + $0x3fc] sm:$0xf]
        %v563 = vld [vmem:[%s246 + $0x400] sm:$0xf]
        %v564 = vld [vmem:[%s246 + $0x404] sm:$0xf]
        %v565 = vld [vmem:[%s246 + $0x408] sm:$0xf]
        %v566 = vld [vmem:[%s246 + $0x40c] sm:$0xf]
        %v567 = vld [vmem:[%s246 + $0x410] sm:$0xf]
        %v568 = vld [vmem:[%s246 + $0x414] sm:$0xf]
        %v569 = vld [vmem:[%s246 + $0x418] sm:$0xf]
        %v570 = vld [vmem:[%s246 + $0x41c] sm:$0xf]
        %v571 = vld [vmem:[%s246 + $0x420] sm:$0xf]
        %v572 = vld [vmem:[%s246 + $0x424] sm:$0xf]
        %v573 = vld [vmem:[%s246 + $0x428] sm:$0xf]
        %v574 = vld [vmem:[%s246 + $0x42c] sm:$0xf]
        %v575 = vld [vmem:[%s246 + $0x430] sm:$0xf]
        %v576 = vld [vmem:[%s246 + $0x434] sm:$0xf]
        %v577 = vld [vmem:[%s246 + $0x438] sm:$0xf]
        %v578 = vld [vmem:[%s246 + $0x43c] sm:$0xf]
        %v579 = vld [vmem:[%s246 + $0x440] sm:$0xf]
        %v580 = vld [vmem:[%s246 + $0x444] sm:$0xf]
        %v581 = vld [vmem:[%s246 + $0x448] sm:$0xf]
        %v582 = vld [vmem:[%s246 + $0x44c] sm:$0xf]
        %v583 = vld [vmem:[%s246 + $0x450] sm:$0xf]
        %v584 = vld [vmem:[%s246 + $0x454] sm:$0xf]
        %v585 = vld [vmem:[%s246 + $0x458] sm:$0xf]
        %v586 = vld [vmem:[%s246 + $0x45c] sm:$0xf]
        %v587 = vld [vmem:[%s246 + $0x460] sm:$0xf]
        %v588 = vld [vmem:[%s246 + $0x464] sm:$0xf]
        %v589 = vld [vmem:[%s246 + $0x468] sm:$0xf]
        %v590 = vld [vmem:[%s246 + $0x46c] sm:$0xf]
        %v591 = vld [vmem:[%s246 + $0x470] sm:$0xf]
        %v592 = vld [vmem:[%s246 + $0x474] sm:$0xf]
        %v593 = vld [vmem:[%s246 + $0x478] sm:$0xf]
        %v594 = vld [vmem:[%s246 + $0x47c] sm:$0xf]
        %v595 = vld [vmem:[%s246 + $0x480] sm:$0xf]
        %v596 = vld [vmem:[%s246 + $0x484] sm:$0xf]
        %v597 = vld [vmem:[%s246 + $0x488] sm:$0xf]
        %v598 = vld [vmem:[%s246 + $0x48c] sm:$0xf]
        %v599 = vld [vmem:[%s246 + $0x490] sm:$0xf]
        %v600 = vld [vmem:[%s246 + $0x494] sm:$0xf]
        %v601 = vld [vmem:[%s246 + $0x498] sm:$0xf]
        %v602 = vld [vmem:[%s246 + $0x49c] sm:$0xf]
        %v603 = vld [vmem:[%s246 + $0x4a0] sm:$0xf]
        %v604 = vld [vmem:[%s246 + $0x4a4] sm:$0xf]
        %v605 = vld [vmem:[%s246 + $0x4a8] sm:$0xf]
        %v606 = vld [vmem:[%s246 + $0x4ac] sm:$0xf]
        %v607 = vld [vmem:[%s246 + $0x4b0] sm:$0xf]
        %v608 = vld [vmem:[%s246 + $0x4b4] sm:$0xf]
        %v609 = vld [vmem:[%s246 + $0x4b8] sm:$0xf]
        %v610 = vld [vmem:[%s246 + $0x4bc] sm:$0xf]
        %v611 = vld [vmem:[%s246 + $0x4c0] sm:$0xf]
        %v612 = vld [vmem:[%s246 + $0x4c4] sm:$0xf]
        %v613 = vld [vmem:[%s246 + $0x4c8] sm:$0xf]
        %v614 = vld [vmem:[%s246 + $0x4cc] sm:$0xf]
        %v615 = vld [vmem:[%s246 + $0x4d0] sm:$0xf]
        %v616 = vld [vmem:[%s246 + $0x4d4] sm:$0xf]
        %v617 = vld [vmem:[%s246 + $0x4d8] sm:$0xf]
        %v618 = vld [vmem:[%s246 + $0x4dc] sm:$0xf]
        %v619 = vld [vmem:[%s246 + $0x4e0] sm:$0xf]
        %v620 = vld [vmem:[%s246 + $0x4e4] sm:$0xf]
        %v621 = vld [vmem:[%s246 + $0x4e8] sm:$0xf]
        %v622 = vld [vmem:[%s246 + $0x4ec] sm:$0xf]
        %v623 = vld [vmem:[%s246 + $0x4f0] sm:$0xf]
        %v624 = vld [vmem:[%s246 + $0x4f4] sm:$0xf]
        %v625 = vld [vmem:[%s246 + $0x4f8] sm:$0xf]
        %v626 = vld [vmem:[%s246 + $0x4fc] sm:$0xf]
        %v627 = vld [vmem:[%s246 + $0x500] sm:$0xf]
        %v628 = vld [vmem:[%s246 + $0x504] sm:$0xf]
        %v629 = vld [vmem:[%s246 + $0x508] sm:$0xf]
        %v630 = vld [vmem:[%s246 + $0x50c] sm:$0xf]
        %v631 = vld [vmem:[%s246 + $0x510] sm:$0xf]
        %v632 = vld [vmem:[%s246 + $0x514] sm:$0xf]
        %v633 = vld [vmem:[%s246 + $0x518] sm:$0xf]
        %v634 = vld [vmem:[%s246 + $0x51c] sm:$0xf]
        %v635 = vld [vmem:[%s246 + $0x520] sm:$0xf]
        %v636 = vld [vmem:[%s246 + $0x524] sm:$0xf]
        %v637 = vld [vmem:[%s246 + $0x528] sm:$0xf]
        %v638 = vld [vmem:[%s246 + $0x52c] sm:$0xf]
        %v639 = vld [vmem:[%s246 + $0x530] sm:$0xf]
        %v640 = vld [vmem:[%s246 + $0x534] sm:$0xf]
        %v641 = vld [vmem:[%s246 + $0x538] sm:$0xf]
        %v642 = vld [vmem:[%s246 + $0x53c] sm:$0xf]
        %v643 = vld [vmem:[%s246 + $0x540] sm:$0xf]
        %v644 = vld [vmem:[%s246 + $0x544] sm:$0xf]
        %v645 = vld [vmem:[%s246 + $0x548] sm:$0xf]
        %v646 = vld [vmem:[%s246 + $0x54c] sm:$0xf]
        %v647 = vld [vmem:[%s246 + $0x550] sm:$0xf]
        %v648 = vld [vmem:[%s246 + $0x554] sm:$0xf]
        %v649 = vld [vmem:[%s246 + $0x558] sm:$0xf]
        %v650 = vld [vmem:[%s246 + $0x55c] sm:$0xf]
        %v651 = vld [vmem:[%s246 + $0x560] sm:$0xf]
        %v652 = vld [vmem:[%s246 + $0x564] sm:$0xf]
        %v653 = vld [vmem:[%s246 + $0x568] sm:$0xf]
        %v654 = vld [vmem:[%s246 + $0x56c] sm:$0xf]
        %v655 = vld [vmem:[%s246 + $0x570] sm:$0xf]
        %v656 = vld [vmem:[%s246 + $0x574] sm:$0xf]
        %v657 = vld [vmem:[%s246 + $0x578] sm:$0xf]
        %v658 = vld [vmem:[%s246 + $0x57c] sm:$0xf]
        %v662 = vcombine.high %v304, %v304
        %v664 = vunpack.c.l.s4 1966171168
        %v665 = vunpack.c.0.s8 %v664
        %v666 = vlaneseq
        %v667 = vshrl.u32 %v666, 7
        %v668 = vsub.s32 %v665, %v667
        %v669 = vrot.slane %v304, %v668
        %v671 = vunpack.c.l.s4 1966171168
        %v672 = vunpack.c.0.s8 %v671
        %v673 = vlaneseq
        %v674 = vshrl.u32 %v673, 7
        %v675 = vsub.s32 %v672, %v674
        %v676 = vrot.slane %v662, %v675
        %v677 = vcombine.high %v669, %v669
        %v678 = vcombine.high %v676, %v676
        %v680 = vunpack.c.l.s4 1966171168
        %v681 = vunpack.c.0.s8 %v680
        %v682 = vlaneseq
        %v683 = vshrl.u32 %v682, 7
        %v684 = vsub.s32 %v681, %v683
        %v685 = vrot.slane %v669, %v684
        %v687 = vunpack.c.l.s4 1966171168
        %v688 = vunpack.c.0.s8 %v687
        %v689 = vlaneseq
        %v690 = vshrl.u32 %v689, 7
        %v691 = vsub.s32 %v688, %v690
        %v692 = vrot.slane %v676, %v691
        %v694 = vunpack.c.l.s4 1966171168
        %v695 = vunpack.c.0.s8 %v694
        %v696 = vlaneseq
        %v697 = vshrl.u32 %v696, 7
        %v698 = vsub.s32 %v695, %v697
        %v699 = vrot.slane %v677, %v698
        %v701 = vunpack.c.l.s4 1966171168
        %v702 = vunpack.c.0.s8 %v701
        %v703 = vlaneseq
        %v704 = vshrl.u32 %v703, 7
        %v705 = vsub.s32 %v702, %v704
        %v706 = vrot.slane %v678, %v705
        %v707 = vcombine.high %v685, %v685
        %v708 = vcombine.high %v692, %v692
        %v709 = vcombine.high %v699, %v699
        %v710 = vcombine.high %v706, %v706
        %v711 = vcombine.high %v305, %v305
        %v713 = vunpack.c.l.s4 1966171168
        %v714 = vunpack.c.0.s8 %v713
        %v715 = vlaneseq
        %v716 = vshrl.u32 %v715, 7
        %v717 = vsub.s32 %v714, %v716
        %v718 = vrot.slane %v305, %v717
        %v720 = vunpack.c.l.s4 1966171168
        %v721 = vunpack.c.0.s8 %v720
        %v722 = vlaneseq
        %v723 = vshrl.u32 %v722, 7
        %v724 = vsub.s32 %v721, %v723
        %v725 = vrot.slane %v711, %v724
        %v726 = vcombine.high %v718, %v718
        %v727 = vcombine.high %v725, %v725
        %v729 = vunpack.c.l.s4 1966171168
        %v730 = vunpack.c.0.s8 %v729
        %v731 = vlaneseq
        %v732 = vshrl.u32 %v731, 7
        %v733 = vsub.s32 %v730, %v732
        %v734 = vrot.slane %v718, %v733
        %v736 = vunpack.c.l.s4 1966171168
        %v737 = vunpack.c.0.s8 %v736
        %v738 = vlaneseq
        %v739 = vshrl.u32 %v738, 7
        %v740 = vsub.s32 %v737, %v739
        %v741 = vrot.slane %v725, %v740
        %v743 = vunpack.c.l.s4 1966171168
        %v744 = vunpack.c.0.s8 %v743
        %v745 = vlaneseq
        %v746 = vshrl.u32 %v745, 7
        %v747 = vsub.s32 %v744, %v746
        %v748 = vrot.slane %v726, %v747
        %v750 = vunpack.c.l.s4 1966171168
        %v751 = vunpack.c.0.s8 %v750
        %v752 = vlaneseq
        %v753 = vshrl.u32 %v752, 7
        %v754 = vsub.s32 %v751, %v753
        %v755 = vrot.slane %v727, %v754
        %v756 = vcombine.high %v734, %v734
        %v757 = vcombine.high %v741, %v741
        %v758 = vcombine.high %v748, %v748
        %v759 = vcombine.high %v755, %v755
        %v760 = vcombine.high %v306, %v306
        %v762 = vunpack.c.l.s4 1966171168
        %v763 = vunpack.c.0.s8 %v762
        %v764 = vlaneseq
        %v765 = vshrl.u32 %v764, 7
        %v766 = vsub.s32 %v763, %v765
        %v767 = vrot.slane %v306, %v766
        %v769 = vunpack.c.l.s4 1966171168
        %v770 = vunpack.c.0.s8 %v769
        %v771 = vlaneseq
        %v772 = vshrl.u32 %v771, 7
        %v773 = vsub.s32 %v770, %v772
        %v774 = vrot.slane %v760, %v773
        %v775 = vcombine.high %v767, %v767
        %v776 = vcombine.high %v774, %v774
        %v778 = vunpack.c.l.s4 1966171168
        %v779 = vunpack.c.0.s8 %v778
        %v780 = vlaneseq
        %v781 = vshrl.u32 %v780, 7
        %v782 = vsub.s32 %v779, %v781
        %v783 = vrot.slane %v767, %v782
        %v785 = vunpack.c.l.s4 1966171168
        %v786 = vunpack.c.0.s8 %v785
        %v787 = vlaneseq
        %v788 = vshrl.u32 %v787, 7
        %v789 = vsub.s32 %v786, %v788
        %v790 = vrot.slane %v774, %v789
        %v792 = vunpack.c.l.s4 1966171168
        %v793 = vunpack.c.0.s8 %v792
        %v794 = vlaneseq
        %v795 = vshrl.u32 %v794, 7
        %v796 = vsub.s32 %v793, %v795
        %v797 = vrot.slane %v775, %v796
        %v799 = vunpack.c.l.s4 1966171168
        %v800 = vunpack.c.0.s8 %v799
        %v801 = vlaneseq
        %v802 = vshrl.u32 %v801, 7
        %v803 = vsub.s32 %v800, %v802
        %v804 = vrot.slane %v776, %v803
        %v805 = vcombine.high %v783, %v783
        %v806 = vcombine.high %v797, %v797
        %v1181 = vunpack.c.l.b16 %v307
        %v1182 = vunpack.c.l.b16 %v308
        %v1183 = vunpack.c.l.b16 %v309
        %v1184 = vunpack.c.l.b16 %v310
        %v1185 = vunpack.c.l.b16 %v311
        %v1186 = vunpack.c.l.b16 %v312
        %v1187 = vunpack.c.l.b16 %v313
        %v1188 = vunpack.c.l.b16 %v314
        %v1189 = vunpack.c.l.b16 %v315
        %v1190 = vunpack.c.l.b16 %v316
        %v1191 = vunpack.c.l.b16 %v317
        %v1192 = vunpack.c.l.b16 %v318
        %v1193 = vunpack.c.l.b16 %v319
        %v1194 = vunpack.c.l.b16 %v320
        %v1195 = vunpack.c.l.b16 %v321
        %v1196 = vunpack.c.l.b16 %v322
        %v1197 = vunpack.c.l.b16 %v323
        %v1198 = vunpack.c.l.b16 %v324
        %v1199 = vunpack.c.l.b16 %v325
        %v1200 = vunpack.c.l.b16 %v326
        %v1201 = vunpack.c.l.b16 %v327
        %v1202 = vunpack.c.l.b16 %v328
        %v1203 = vunpack.c.l.b16 %v329
        %v1204 = vunpack.c.l.b16 %v330
        %v1205 = vunpack.c.l.b16 %v331
        %v1206 = vunpack.c.l.b16 %v332
        %v1207 = vunpack.c.l.b16 %v333
        %v1208 = vunpack.c.l.b16 %v334
        %v1209 = vunpack.c.l.b16 %v335
        %v1210 = vunpack.c.l.b16 %v336
        %v1211 = vunpack.c.l.b16 %v337
        %v1212 = vunpack.c.l.b16 %v338
        %v1213 = vunpack.c.l.b16 %v339
        %v1214 = vunpack.c.l.b16 %v340
        %v1215 = vunpack.c.l.b16 %v341
        %v1216 = vunpack.c.l.b16 %v342
        %v1217 = vunpack.c.l.b16 %v343
        %v1218 = vunpack.c.l.b16 %v344
        %v1219 = vunpack.c.l.b16 %v345
        %v1220 = vunpack.c.l.b16 %v346
        %v1221 = vunpack.c.l.b16 %v347
        %v1222 = vunpack.c.l.b16 %v348
        %v1223 = vunpack.c.l.b16 %v349
        %v1224 = vunpack.c.l.b16 %v350
        %v1225 = vunpack.c.l.b16 %v351
        %v1226 = vunpack.c.l.b16 %v352
        %v1227 = vunpack.c.l.b16 %v353
        %v1228 = vunpack.c.l.b16 %v354
        %v1229 = vunpack.c.l.b16 %v355
        %v1230 = vunpack.c.l.b16 %v356
        %v1231 = vunpack.c.l.b16 %v357
        %v1232 = vunpack.c.l.b16 %v358
        %v1233 = vunpack.c.l.b16 %v359
        %v1234 = vunpack.c.l.b16 %v360
        %v1235 = vunpack.c.l.b16 %v361
        %v1236 = vunpack.c.l.b16 %v362
        %v1237 = vunpack.c.l.b16 %v363
        %v1238 = vunpack.c.l.b16 %v364
        %v1239 = vunpack.c.l.b16 %v365
        %v1240 = vunpack.c.l.b16 %v366
        %v1241 = vunpack.c.l.b16 %v367
        %v1242 = vunpack.c.l.b16 %v368
        %v1243 = vunpack.c.l.b16 %v369
        %v1244 = vunpack.c.l.b16 %v370
        %v1245 = vunpack.c.l.b16 %v371
        %v1246 = vunpack.c.l.b16 %v372
        %v1247 = vunpack.c.l.b16 %v373
        %v1248 = vunpack.c.l.b16 %v374
        %v1249 = vunpack.c.l.b16 %v375
        %v1250 = vunpack.c.l.b16 %v376
        %v1251 = vunpack.c.l.b16 %v377
        %v1252 = vunpack.c.l.b16 %v378
        %v1253 = vunpack.c.l.b16 %v379
        %v1254 = vunpack.c.l.b16 %v380
        %v1255 = vunpack.c.l.b16 %v381
        %v1256 = vunpack.c.l.b16 %v382
        %v1257 = vunpack.c.l.b16 %v383
        %v1258 = vunpack.c.l.b16 %v384
        %v1259 = vunpack.c.l.b16 %v385
        %v1260 = vunpack.c.l.b16 %v386
        %v1261 = vunpack.c.l.b16 %v387
        %v1262 = vunpack.c.l.b16 %v388
        %v1263 = vunpack.c.l.b16 %v389
        %v1264 = vunpack.c.l.b16 %v390
        %v1265 = vunpack.c.l.b16 %v391
        %v1266 = vunpack.c.l.b16 %v392
        %v1267 = vunpack.c.l.b16 %v393
        %v1268 = vunpack.c.l.b16 %v394
        %v1269 = vunpack.c.l.b16 %v395
        %v1270 = vunpack.c.l.b16 %v396
        %v1271 = vunpack.c.l.b16 %v397
        %v1272 = vunpack.c.l.b16 %v398
        %v1273 = vunpack.c.l.b16 %v399
        %v1274 = vunpack.c.l.b16 %v400
        %v1275 = vunpack.c.l.b16 %v401
        %v1276 = vunpack.c.l.b16 %v402
        %v1277 = vunpack.c.l.b16 %v403
        %v1278 = vunpack.c.l.b16 %v404
        %v1279 = vunpack.c.l.b16 %v405
        %v1280 = vunpack.c.l.b16 %v406
        %v1281 = vunpack.c.l.b16 %v407
        %v1282 = vunpack.c.l.b16 %v408
        %v1283 = vunpack.c.l.b16 %v409
        %v1284 = vunpack.c.l.b16 %v410
        %v1285 = vunpack.c.l.b16 %v411
        %v1286 = vunpack.c.l.b16 %v412
        %v1287 = vunpack.c.l.b16 %v413
        %v1288 = vunpack.c.l.b16 %v414
        %v1289 = vunpack.c.l.b16 %v415
        %v1290 = vunpack.c.l.b16 %v416
        %v1291 = vunpack.c.l.b16 %v417
        %v1292 = vunpack.c.l.b16 %v418
        %v1293 = vunpack.c.l.b16 %v419
        %v1294 = vunpack.c.l.b16 %v420
        %v1295 = vunpack.c.l.b16 %v421
        %v1296 = vunpack.c.l.b16 %v422
        %v1297 = vunpack.c.l.b16 %v423
        %v1298 = vunpack.c.l.b16 %v424
        %v1299 = vunpack.c.l.b16 %v425
        %v1300 = vunpack.c.l.b16 %v426
        %v1301 = vunpack.c.l.b16 %v427
        %v1302 = vunpack.c.l.b16 %v428
        %v1303 = vunpack.c.l.b16 %v429
        %v1304 = vunpack.c.l.b16 %v430
        %v1305 = vunpack.c.l.b16 %v431
        %v1306 = vunpack.c.l.b16 %v432
        %v1307 = vunpack.c.l.b16 %v433
        %v1308 = vunpack.c.l.b16 %v434
        %v1309 = vunpack.c.l.b16 %v435
        %v1310 = vunpack.c.l.b16 %v436
        %v1311 = vunpack.c.l.b16 %v437
        %v1312 = vunpack.c.l.b16 %v438
        %v1313 = vunpack.c.l.b16 %v439
        %v1314 = vunpack.c.l.b16 %v440
        %v1315 = vunpack.c.l.b16 %v441
        %v1316 = vunpack.c.l.b16 %v442
        %v1317 = vunpack.c.l.b16 %v443
        %v1318 = vunpack.c.l.b16 %v444
        %v1319 = vunpack.c.l.b16 %v445
        %v1320 = vunpack.c.l.b16 %v446
        %v1321 = vunpack.c.l.b16 %v447
        %v1322 = vunpack.c.l.b16 %v448
        %v1323 = vunpack.c.l.b16 %v449
        %v1324 = vunpack.c.l.b16 %v450
        %v1325 = vunpack.c.l.b16 %v451
        %v1326 = vunpack.c.l.b16 %v452
        %v1327 = vunpack.c.l.b16 %v453
        %v1328 = vunpack.c.l.b16 %v454
        %v1329 = vunpack.c.l.b16 %v455
        %v1330 = vunpack.c.l.b16 %v456
        %v1331 = vunpack.c.l.b16 %v457
        %v1332 = vunpack.c.l.b16 %v458
        %v1333 = vunpack.c.l.b16 %v459
        %v1334 = vunpack.c.l.b16 %v460
        %v1335 = vunpack.c.l.b16 %v461
        %v1336 = vunpack.c.l.b16 %v462
        %v1337 = vunpack.c.l.b16 %v463
        %v1338 = vunpack.c.l.b16 %v464
        %v1339 = vunpack.c.l.b16 %v465
        %v1340 = vunpack.c.l.b16 %v466
        %v1341 = vunpack.c.l.b16 %v467
        %v1342 = vunpack.c.l.b16 %v468
        %v1343 = vunpack.c.l.b16 %v469
        %v1344 = vunpack.c.l.b16 %v470
        %v1345 = vunpack.c.l.b16 %v471
        %v1346 = vunpack.c.l.b16 %v472
        %v1347 = vunpack.c.l.b16 %v473
        %v1348 = vunpack.c.l.b16 %v474
        %v1349 = vunpack.c.l.b16 %v475
        %v1350 = vunpack.c.l.b16 %v476
        %v1351 = vunpack.c.l.b16 %v477
        %v1352 = vunpack.c.l.b16 %v478
        %v1353 = vunpack.c.l.b16 %v479
        %v1354 = vunpack.c.l.b16 %v480
        %v1355 = vunpack.c.l.b16 %v481
        %v1356 = vunpack.c.l.b16 %v482
        %v1357 = vunpack.c.l.b16 %v483
        %v1358 = vunpack.c.l.b16 %v484
        %v1359 = vunpack.c.l.b16 %v485
        %v1360 = vunpack.c.l.b16 %v486
        %v1361 = vunpack.c.l.b16 %v487
        %v1362 = vunpack.c.l.b16 %v488
        %v1363 = vunpack.c.l.b16 %v489
        %v1364 = vunpack.c.l.b16 %v490
        %v1365 = vunpack.c.l.b16 %v491
        %v1366 = vunpack.c.l.b16 %v492
        %v1367 = vunpack.c.l.b16 %v493
        %v1368 = vunpack.c.l.b16 %v494
        %v1369 = vunpack.c.l.b16 %v495
        %v1370 = vunpack.c.l.b16 %v496
        %v1371 = vunpack.c.l.b16 %v497
        %v1372 = vunpack.c.l.b16 %v498
        %v1373 = vunpack.c.l.b16 %v499
        %v1374 = vunpack.c.l.b16 %v500
        %v1375 = vunpack.c.l.b16 %v501
        %v1376 = vunpack.c.l.b16 %v502
        %v1377 = vunpack.c.l.b16 %v503
        %v1378 = vunpack.c.l.b16 %v504
        %v1379 = vunpack.c.l.b16 %v505
        %v1380 = vunpack.c.l.b16 %v506
        %v1381 = vunpack.c.l.b16 %v507
        %v1382 = vunpack.c.l.b16 %v508
        %v1383 = vunpack.c.l.b16 %v509
        %v1384 = vunpack.c.l.b16 %v510
        %v1385 = vunpack.c.l.b16 %v511
        %v1386 = vunpack.c.l.b16 %v512
        %v1387 = vunpack.c.l.b16 %v513
        %v1388 = vunpack.c.l.b16 %v514
        %v1389 = vunpack.c.l.b16 %v515
        %v1390 = vunpack.c.l.b16 %v516
        %v1391 = vunpack.c.l.b16 %v517
        %v1392 = vunpack.c.l.b16 %v518
        %v1393 = vunpack.c.l.b16 %v519
        %v1394 = vunpack.c.l.b16 %v520
        %v1395 = vunpack.c.l.b16 %v521
        %v1396 = vunpack.c.l.b16 %v522
        %v1397 = vunpack.c.l.b16 %v523
        %v1398 = vunpack.c.l.b16 %v524
        %v1399 = vunpack.c.l.b16 %v525
        %v1400 = vunpack.c.l.b16 %v526
        %v1401 = vunpack.c.l.b16 %v527
        %v1402 = vunpack.c.l.b16 %v528
        %v1403 = vunpack.c.l.b16 %v529
        %v1404 = vunpack.c.l.b16 %v530
        %v1405 = vunpack.c.l.b16 %v531
        %v1406 = vunpack.c.l.b16 %v532
        %v1407 = vunpack.c.l.b16 %v533
        %v1408 = vunpack.c.l.b16 %v534
        %v1409 = vunpack.c.l.b16 %v535
        %v1410 = vunpack.c.l.b16 %v536
        %v1411 = vunpack.c.l.b16 %v537
        %v1412 = vunpack.c.l.b16 %v538
        %v1413 = vunpack.c.l.b16 %v539
        %v1414 = vunpack.c.l.b16 %v540
        %v1415 = vunpack.c.l.b16 %v541
        %v1416 = vunpack.c.l.b16 %v542
        %v1417 = vunpack.c.l.b16 %v543
        %v1418 = vunpack.c.l.b16 %v544
        %v1419 = vunpack.c.l.b16 %v545
        %v1420 = vunpack.c.l.b16 %v546
        %v1421 = vunpack.c.l.b16 %v547
        %v1422 = vunpack.c.l.b16 %v548
        %v1423 = vunpack.c.l.b16 %v549
        %v1424 = vunpack.c.l.b16 %v550
        %v1425 = vunpack.c.l.b16 %v551
        %v1426 = vunpack.c.l.b16 %v552
        %v1427 = vunpack.c.l.b16 %v553
        %v1428 = vunpack.c.l.b16 %v554
        %v1429 = vunpack.c.l.b16 %v555
        %v1430 = vunpack.c.l.b16 %v556
        %v1431 = vunpack.c.l.b16 %v557
        %v1432 = vunpack.c.l.b16 %v558
        %v1433 = vunpack.c.l.b16 %v559
        %v1434 = vunpack.c.l.b16 %v560
        %v1435 = vunpack.c.l.b16 %v561
        %v1436 = vunpack.c.l.b16 %v562
        %v1437 = vunpack.c.l.b16 %v563
        %v1438 = vunpack.c.l.b16 %v564
        %v1439 = vunpack.c.l.b16 %v565
        %v1440 = vunpack.c.l.b16 %v566
        %v1441 = vunpack.c.l.b16 %v567
        %v1442 = vunpack.c.l.b16 %v568
        %v1443 = vunpack.c.l.b16 %v569
        %v1444 = vunpack.c.l.b16 %v570
        %v1445 = vunpack.c.l.b16 %v571
        %v1446 = vunpack.c.l.b16 %v572
        %v1447 = vunpack.c.l.b16 %v573
        %v1448 = vunpack.c.l.b16 %v574
        %v1449 = vunpack.c.l.b16 %v575
        %v1450 = vunpack.c.l.b16 %v576
        %v1451 = vunpack.c.l.b16 %v577
        %v1452 = vunpack.c.l.b16 %v578
        %v1453 = vunpack.c.l.b16 %v579
        %v1454 = vunpack.c.l.b16 %v580
        %v1455 = vunpack.c.l.b16 %v581
        %v1456 = vunpack.c.l.b16 %v582
        %v1457 = vunpack.c.l.b16 %v583
        %v1458 = vunpack.c.l.b16 %v584
        %v1459 = vunpack.c.l.b16 %v585
        %v1460 = vunpack.c.l.b16 %v586
        %v1461 = vunpack.c.l.b16 %v587
        %v1462 = vunpack.c.l.b16 %v588
        %v1463 = vunpack.c.l.b16 %v589
        %v1464 = vunpack.c.l.b16 %v590
        %v1465 = vunpack.c.l.b16 %v591
        %v1466 = vunpack.c.l.b16 %v592
        %v1467 = vunpack.c.l.b16 %v593
        %v1468 = vunpack.c.l.b16 %v594
        %v1469 = vunpack.c.l.b16 %v595
        %v1470 = vunpack.c.l.b16 %v596
        %v1471 = vunpack.c.l.b16 %v597
        %v1472 = vunpack.c.l.b16 %v598
        %v1473 = vunpack.c.l.b16 %v599
        %v1474 = vunpack.c.l.b16 %v600
        %v1475 = vunpack.c.l.b16 %v601
        %v1476 = vunpack.c.l.b16 %v602
        %v1477 = vunpack.c.l.b16 %v603
        %v1478 = vunpack.c.l.b16 %v604
        %v1479 = vunpack.c.l.b16 %v605
        %v1480 = vunpack.c.l.b16 %v606
        %v1481 = vunpack.c.l.b16 %v607
        %v1482 = vunpack.c.l.b16 %v608
        %v1483 = vunpack.c.l.b16 %v609
        %v1484 = vunpack.c.l.b16 %v610
        %v1485 = vunpack.c.l.b16 %v611
        %v1486 = vunpack.c.l.b16 %v612
        %v1487 = vunpack.c.l.b16 %v613
        %v1488 = vunpack.c.l.b16 %v614
        %v1489 = vunpack.c.l.b16 %v615
        %v1490 = vunpack.c.l.b16 %v616
        %v1491 = vunpack.c.l.b16 %v617
        %v1492 = vunpack.c.l.b16 %v618
        %v1493 = vunpack.c.l.b16 %v619
        %v1494 = vunpack.c.l.b16 %v620
        %v1495 = vunpack.c.l.b16 %v621
        %v1496 = vunpack.c.l.b16 %v622
        %v1497 = vunpack.c.l.b16 %v623
        %v1498 = vunpack.c.l.b16 %v624
        %v1499 = vunpack.c.l.b16 %v625
        %v1500 = vunpack.c.l.b16 %v626
        %v1501 = vunpack.c.l.b16 %v627
        %v1502 = vunpack.c.l.b16 %v628
        %v1503 = vunpack.c.l.b16 %v629
        %v1504 = vunpack.c.l.b16 %v630
        %v1505 = vunpack.c.l.b16 %v631
        %v1506 = vunpack.c.l.b16 %v632
        %v1507 = vunpack.c.l.b16 %v633
        %v1508 = vunpack.c.l.b16 %v634
        %v1509 = vunpack.c.l.b16 %v635
        %v1510 = vunpack.c.l.b16 %v636
        %v1511 = vunpack.c.l.b16 %v637
        %v1512 = vunpack.c.l.b16 %v638
        %v1513 = vunpack.c.l.b16 %v639
        %v1514 = vunpack.c.l.b16 %v640
        %v1515 = vunpack.c.l.b16 %v641
        %v1516 = vunpack.c.l.b16 %v642
        %v1517 = vunpack.c.l.b16 %v643
        %v1518 = vunpack.c.l.b16 %v644
        %v1519 = vunpack.c.l.b16 %v645
        %v1520 = vunpack.c.l.b16 %v646
        %v1521 = vunpack.c.l.b16 %v647
        %v1522 = vunpack.c.l.b16 %v648
        %v1523 = vunpack.c.l.b16 %v649
        %v1524 = vunpack.c.l.b16 %v650
        %v1525 = vunpack.c.l.b16 %v651
        %v1526 = vunpack.c.l.b16 %v652
        %v1527 = vunpack.c.l.b16 %v653
        %v1528 = vunpack.c.l.b16 %v654
        %v1529 = vunpack.c.l.b16 %v655
        %v1530 = vunpack.c.l.b16 %v656
        %v1531 = vunpack.c.l.b16 %v657
        %v1532 = vunpack.c.l.b16 %v658
        %v1533 = vpack.c.b16 %v1182, %v1181
        %v1534 = vpack.c.b16 %v1184, %v1183
        %v1535 = vpack.c.b16 %v1186, %v1185
        %v1536 = vpack.c.b16 %v1188, %v1187
        %v1537 = vpack.c.b16 %v1190, %v1189
        %v1538 = vpack.c.b16 %v1192, %v1191
        %v1539 = vpack.c.b16 %v1194, %v1193
        %v1540 = vpack.c.b16 %v1196, %v1195
        %v1541 = vpack.c.b16 %v1198, %v1197
        %v1542 = vpack.c.b16 %v1200, %v1199
        %v1543 = vpack.c.b16 %v1202, %v1201
        %v1544 = vpack.c.b16 %v1204, %v1203
        %v1545 = vpack.c.b16 %v1206, %v1205
        %v1546 = vpack.c.b16 %v1208, %v1207
        %v1547 = vpack.c.b16 %v1210, %v1209
        %v1548 = vpack.c.b16 %v1212, %v1211
        %v1549 = vpack.c.b16 %v1214, %v1213
        %v1550 = vpack.c.b16 %v1216, %v1215
        %v1551 = vpack.c.b16 %v1218, %v1217
        %v1552 = vpack.c.b16 %v1220, %v1219
        %v1553 = vpack.c.b16 %v1222, %v1221
        %v1554 = vpack.c.b16 %v1224, %v1223
        %v1555 = vpack.c.b16 %v1226, %v1225
        %v1556 = vpack.c.b16 %v1228, %v1227
        %v1557 = vpack.c.b16 %v1230, %v1229
        %v1558 = vpack.c.b16 %v1232, %v1231
        %v1559 = vpack.c.b16 %v1234, %v1233
        %v1560 = vpack.c.b16 %v1236, %v1235
        %v1561 = vpack.c.b16 %v1238, %v1237
        %v1562 = vpack.c.b16 %v1240, %v1239
        %v1563 = vpack.c.b16 %v1242, %v1241
        %v1564 = vpack.c.b16 %v1244, %v1243
        %v1565 = vpack.c.b16 %v1246, %v1245
        %v1566 = vpack.c.b16 %v1248, %v1247
        %v1567 = vpack.c.b16 %v1250, %v1249
        %v1568 = vpack.c.b16 %v1252, %v1251
        %v1569 = vpack.c.b16 %v1254, %v1253
        %v1570 = vpack.c.b16 %v1256, %v1255
        %v1571 = vpack.c.b16 %v1258, %v1257
        %v1572 = vpack.c.b16 %v1260, %v1259
        %v1573 = vpack.c.b16 %v1262, %v1261
        %v1574 = vpack.c.b16 %v1264, %v1263
        %v1575 = vpack.c.b16 %v1266, %v1265
        %v1576 = vpack.c.b16 %v1268, %v1267
        %v1577 = vpack.c.b16 %v1270, %v1269
        %v1578 = vpack.c.b16 %v1272, %v1271
        %v1579 = vpack.c.b16 %v1274, %v1273
        %v1580 = vpack.c.b16 %v1276, %v1275
        %v1581 = vpack.c.b16 %v1278, %v1277
        %v1582 = vpack.c.b16 %v1280, %v1279
        %v1583 = vpack.c.b16 %v1282, %v1281
        %v1584 = vpack.c.b16 %v1284, %v1283
        %v1585 = vpack.c.b16 %v1286, %v1285
        %v1586 = vpack.c.b16 %v1288, %v1287
        %v1587 = vpack.c.b16 %v1290, %v1289
        %v1588 = vpack.c.b16 %v1292, %v1291
        %v1589 = vpack.c.b16 %v1294, %v1293
        %v1590 = vpack.c.b16 %v1296, %v1295
        %v1591 = vpack.c.b16 %v1298, %v1297
        %v1592 = vpack.c.b16 %v1300, %v1299
        %v1593 = vpack.c.b16 %v1302, %v1301
        %v1594 = vpack.c.b16 %v1304, %v1303
        %v1595 = vpack.c.b16 %v1306, %v1305
        %v1596 = vpack.c.b16 %v1308, %v1307
        %v1597 = vpack.c.b16 %v1310, %v1309
        %v1598 = vpack.c.b16 %v1312, %v1311
        %v1599 = vpack.c.b16 %v1314, %v1313
        %v1600 = vpack.c.b16 %v1316, %v1315
        %v1601 = vpack.c.b16 %v1318, %v1317
        %v1602 = vpack.c.b16 %v1320, %v1319
        %v1603 = vpack.c.b16 %v1322, %v1321
        %v1604 = vpack.c.b16 %v1324, %v1323
        %v1605 = vpack.c.b16 %v1326, %v1325
        %v1606 = vpack.c.b16 %v1328, %v1327
        %v1607 = vpack.c.b16 %v1330, %v1329
        %v1608 = vpack.c.b16 %v1332, %v1331
        %v1609 = vpack.c.b16 %v1334, %v1333
        %v1610 = vpack.c.b16 %v1336, %v1335
        %v1611 = vpack.c.b16 %v1338, %v1337
        %v1612 = vpack.c.b16 %v1340, %v1339
        %v1613 = vpack.c.b16 %v1342, %v1341
        %v1614 = vpack.c.b16 %v1344, %v1343
        %v1615 = vpack.c.b16 %v1346, %v1345
        %v1616 = vpack.c.b16 %v1348, %v1347
        %v1617 = vpack.c.b16 %v1350, %v1349
        %v1618 = vpack.c.b16 %v1352, %v1351
        %v1619 = vpack.c.b16 %v1354, %v1353
        %v1620 = vpack.c.b16 %v1356, %v1355
        %v1621 = vpack.c.b16 %v1358, %v1357
        %v1622 = vpack.c.b16 %v1360, %v1359
        %v1623 = vpack.c.b16 %v1362, %v1361
        %v1624 = vpack.c.b16 %v1364, %v1363
        %v1625 = vpack.c.b16 %v1366, %v1365
        %v1626 = vpack.c.b16 %v1368, %v1367
        %v1627 = vpack.c.b16 %v1370, %v1369
        %v1628 = vpack.c.b16 %v1372, %v1371
        %v1629 = vpack.c.b16 %v1374, %v1373
        %v1630 = vpack.c.b16 %v1376, %v1375
        %v1631 = vpack.c.b16 %v1378, %v1377
        %v1632 = vpack.c.b16 %v1380, %v1379
        %v1633 = vpack.c.b16 %v1382, %v1381
        %v1634 = vpack.c.b16 %v1384, %v1383
        %v1635 = vpack.c.b16 %v1386, %v1385
        %v1636 = vpack.c.b16 %v1388, %v1387
        %v1637 = vpack.c.b16 %v1390, %v1389
        %v1638 = vpack.c.b16 %v1392, %v1391
        %v1639 = vpack.c.b16 %v1394, %v1393
        %v1640 = vpack.c.b16 %v1396, %v1395
        %v1641 = vpack.c.b16 %v1398, %v1397
        %v1642 = vpack.c.b16 %v1400, %v1399
        %v1643 = vpack.c.b16 %v1402, %v1401
        %v1644 = vpack.c.b16 %v1404, %v1403
        %v1645 = vpack.c.b16 %v1406, %v1405
        %v1646 = vpack.c.b16 %v1408, %v1407
        %v1647 = vpack.c.b16 %v1410, %v1409
        %v1648 = vpack.c.b16 %v1412, %v1411
        %v1649 = vpack.c.b16 %v1414, %v1413
        %v1650 = vpack.c.b16 %v1416, %v1415
        %v1651 = vpack.c.b16 %v1418, %v1417
        %v1652 = vpack.c.b16 %v1420, %v1419
        %v1653 = vpack.c.b16 %v1422, %v1421
        %v1654 = vpack.c.b16 %v1424, %v1423
        %v1655 = vpack.c.b16 %v1426, %v1425
        %v1656 = vpack.c.b16 %v1428, %v1427
        %v1657 = vpack.c.b16 %v1430, %v1429
        %v1658 = vpack.c.b16 %v1432, %v1431
        %v1659 = vpack.c.b16 %v1434, %v1433
        %v1660 = vpack.c.b16 %v1436, %v1435
        %v1661 = vpack.c.b16 %v1438, %v1437
        %v1662 = vpack.c.b16 %v1440, %v1439
        %v1663 = vpack.c.b16 %v1442, %v1441
        %v1664 = vpack.c.b16 %v1444, %v1443
        %v1665 = vpack.c.b16 %v1446, %v1445
        %v1666 = vpack.c.b16 %v1448, %v1447
        %v1667 = vpack.c.b16 %v1450, %v1449
        %v1668 = vpack.c.b16 %v1452, %v1451
        %v1669 = vpack.c.b16 %v1454, %v1453
        %v1670 = vpack.c.b16 %v1456, %v1455
        %v1671 = vpack.c.b16 %v1458, %v1457
        %v1672 = vpack.c.b16 %v1460, %v1459
        %v1673 = vpack.c.b16 %v1462, %v1461
        %v1674 = vpack.c.b16 %v1464, %v1463
        %v1675 = vpack.c.b16 %v1466, %v1465
        %v1676 = vpack.c.b16 %v1468, %v1467
        %v1677 = vpack.c.b16 %v1470, %v1469
        %v1678 = vpack.c.b16 %v1472, %v1471
        %v1679 = vpack.c.b16 %v1474, %v1473
        %v1680 = vpack.c.b16 %v1476, %v1475
        %v1681 = vpack.c.b16 %v1478, %v1477
        %v1682 = vpack.c.b16 %v1480, %v1479
        %v1683 = vpack.c.b16 %v1482, %v1481
        %v1684 = vpack.c.b16 %v1484, %v1483
        %v1685 = vpack.c.b16 %v1486, %v1485
        %v1686 = vpack.c.b16 %v1488, %v1487
        %v1687 = vpack.c.b16 %v1490, %v1489
        %v1688 = vpack.c.b16 %v1492, %v1491
        %v1689 = vpack.c.b16 %v1494, %v1493
        %v1690 = vpack.c.b16 %v1496, %v1495
        %v1691 = vpack.c.b16 %v1498, %v1497
        %v1692 = vpack.c.b16 %v1500, %v1499
        %v1693 = vpack.c.b16 %v1502, %v1501
        %v1694 = vpack.c.b16 %v1504, %v1503
        %v1695 = vpack.c.b16 %v1506, %v1505
        %v1696 = vpack.c.b16 %v1508, %v1507
        %v1697 = vpack.c.b16 %v1510, %v1509
        %v1698 = vpack.c.b16 %v1512, %v1511
        %v1699 = vpack.c.b16 %v1514, %v1513
        %v1700 = vpack.c.b16 %v1516, %v1515
        %v1701 = vpack.c.b16 %v1518, %v1517
        %v1702 = vpack.c.b16 %v1520, %v1519
        %v1703 = vpack.c.b16 %v1522, %v1521
        %v1704 = vpack.c.b16 %v1524, %v1523
        %v1705 = vpack.c.b16 %v1526, %v1525
        %v1706 = vpack.c.b16 %v1528, %v1527
        %v1707 = vpack.c.b16 %v1530, %v1529
        %v1708 = vpack.c.b16 %v1532, %v1531
        %1885 = vmatprep.subr.bf16.mxu0 0
        %1886 = vmatpush1.bf16.msra.mxu0 %v1540
        %1887 = vmatprep.subr.bf16.mxu0 0
        %1888 = vmatpush1.bf16.msra.mxu0 %v1539
        %1889 = vmatprep.subr.bf16.mxu0 0
        %1890 = vmatpush1.bf16.msra.mxu0 %v1538
        %1891 = vmatprep.subr.bf16.mxu0 0
        %1892 = vmatpush1.bf16.msra.mxu0 %v1537
        %1893 = vmatprep.subr.bf16.mxu0 0
        %1894 = vmatpush1.bf16.msra.mxu0 %v1536
        %1895 = vmatprep.subr.bf16.mxu0 0
        %1896 = vmatpush1.bf16.msra.mxu0 %v1535
        %1897 = vmatprep.subr.bf16.mxu0 0
        %1898 = vmatpush1.bf16.msra.mxu0 %v1534
        %1899 = vmatprep.subr.bf16.mxu0 0
        %1900 = vmatpush1.bf16.msra.mxu0 %v1533
        %1901 = vmatprep.subr.bf16.mxu0 0
        %1902 = vmatpush2.bf16.msra.mxu0 %v1548
        %1903 = vmatprep.subr.bf16.mxu0 0
        %1904 = vmatpush2.bf16.msra.mxu0 %v1547
        %1905 = vmatprep.subr.bf16.mxu0 0
        %1906 = vmatpush2.bf16.msra.mxu0 %v1546
        %1907 = vmatprep.subr.bf16.mxu0 0
        %1908 = vmatpush2.bf16.msra.mxu0 %v1545
        %1909 = vmatprep.subr.bf16.mxu0 0
        %1910 = vmatpush2.bf16.msra.mxu0 %v1544
        %1911 = vmatprep.subr.bf16.mxu0 0
        %1912 = vmatpush2.bf16.msra.mxu0 %v1543
        %1913 = vmatprep.subr.bf16.mxu0 0
        %1914 = vmatpush2.bf16.msra.mxu0 %v1542
        %1915 = vmatprep.subr.bf16.mxu0 0
        %1916 = vmatpush2.bf16.msra.mxu0 %v1541
        %1917 = vmatprep.mubr.bf16.mxu0 %v699
        %1918 = vmatmul.mubr.bf16.gmra.mxu0 %v685
        %v1919 = vpop.f32.mrf.mxu0
        %v1920 = vadd.f32 0.0, %v1919
        %v1921 = vpop.f32.mrf.mxu0
        %v1922 = vpop.f32.mrf.mxu0
        %v1923 = vpop.f32.mrf.mxu0
        %1924 = vdwg.mxu0
        %1925 = vmatprep.subr.bf16.mxu0 0
        %1926 = vmatpush1.bf16.msra.mxu0 %v1556
        %1927 = vmatprep.subr.bf16.mxu0 0
        %1928 = vmatpush1.bf16.msra.mxu0 %v1555
        %1929 = vmatprep.subr.bf16.mxu0 0
        %1930 = vmatpush1.bf16.msra.mxu0 %v1554
        %1931 = vmatprep.subr.bf16.mxu0 0
        %1932 = vmatpush1.bf16.msra.mxu0 %v1553
        %1933 = vmatprep.subr.bf16.mxu0 0
        %1934 = vmatpush1.bf16.msra.mxu0 %v1552
        %1935 = vmatprep.subr.bf16.mxu0 0
        %1936 = vmatpush1.bf16.msra.mxu0 %v1551
        %1937 = vmatprep.subr.bf16.mxu0 0
        %1938 = vmatpush1.bf16.msra.mxu0 %v1550
        %1939 = vmatprep.subr.bf16.mxu0 0
        %1940 = vmatpush1.bf16.msra.mxu0 %v1549
        %1941 = vmatprep.subr.bf16.mxu0 0
        %1942 = vmatpush2.bf16.msra.mxu0 %v1564
        %1943 = vmatprep.subr.bf16.mxu0 0
        %1944 = vmatpush2.bf16.msra.mxu0 %v1563
        %1945 = vmatprep.subr.bf16.mxu0 0
        %1946 = vmatpush2.bf16.msra.mxu0 %v1562
        %1947 = vmatprep.subr.bf16.mxu0 0
        %1948 = vmatpush2.bf16.msra.mxu0 %v1561
        %1949 = vmatprep.subr.bf16.mxu0 0
        %1950 = vmatpush2.bf16.msra.mxu0 %v1560
        %1951 = vmatprep.subr.bf16.mxu0 0
        %1952 = vmatpush2.bf16.msra.mxu0 %v1559
        %1953 = vmatprep.subr.bf16.mxu0 0
        %1954 = vmatpush2.bf16.msra.mxu0 %v1558
        %1955 = vmatprep.subr.bf16.mxu0 0
        %1956 = vmatpush2.bf16.msra.mxu0 %v1557
        %1957 = vmatprep.mubr.bf16.mxu0 %v709
        %1958 = vmatmul.mubr.bf16.gmra.mxu0 %v707
        %v1959 = vpop.f32.mrf.mxu0
        %v1960 = vadd.f32 %v1920, %v1959
        %v1961 = vpop.f32.mrf.mxu0
        %v1962 = vpop.f32.mrf.mxu0
        %v1963 = vpop.f32.mrf.mxu0
        %1964 = vdwg.mxu0
        %1965 = vmatprep.subr.bf16.mxu0 0
        %1966 = vmatpush1.bf16.msra.mxu0 %v1572
        %1967 = vmatprep.subr.bf16.mxu0 0
        %1968 = vmatpush1.bf16.msra.mxu0 %v1571
        %1969 = vmatprep.subr.bf16.mxu0 0
        %1970 = vmatpush1.bf16.msra.mxu0 %v1570
        %1971 = vmatprep.subr.bf16.mxu0 0
        %1972 = vmatpush1.bf16.msra.mxu0 %v1569
        %1973 = vmatprep.subr.bf16.mxu0 0
        %1974 = vmatpush1.bf16.msra.mxu0 %v1568
        %1975 = vmatprep.subr.bf16.mxu0 0
        %1976 = vmatpush1.bf16.msra.mxu0 %v1567
        %1977 = vmatprep.subr.bf16.mxu0 0
        %1978 = vmatpush1.bf16.msra.mxu0 %v1566
        %1979 = vmatprep.subr.bf16.mxu0 0
        %1980 = vmatpush1.bf16.msra.mxu0 %v1565
        %1981 = vmatprep.subr.bf16.mxu0 0
        %1982 = vmatpush2.bf16.msra.mxu0 %v1580
        %1983 = vmatprep.subr.bf16.mxu0 0
        %1984 = vmatpush2.bf16.msra.mxu0 %v1579
        %1985 = vmatprep.subr.bf16.mxu0 0
        %1986 = vmatpush2.bf16.msra.mxu0 %v1578
        %1987 = vmatprep.subr.bf16.mxu0 0
        %1988 = vmatpush2.bf16.msra.mxu0 %v1577
        %1989 = vmatprep.subr.bf16.mxu0 0
        %1990 = vmatpush2.bf16.msra.mxu0 %v1576
        %1991 = vmatprep.subr.bf16.mxu0 0
        %1992 = vmatpush2.bf16.msra.mxu0 %v1575
        %1993 = vmatprep.subr.bf16.mxu0 0
        %1994 = vmatpush2.bf16.msra.mxu0 %v1574
        %1995 = vmatprep.subr.bf16.mxu0 0
        %1996 = vmatpush2.bf16.msra.mxu0 %v1573
        %1997 = vmatprep.mubr.bf16.mxu0 %v706
        %1998 = vmatmul.mubr.bf16.gmra.mxu0 %v692
        %v1999 = vpop.f32.mrf.mxu0
        %v2000 = vadd.f32 %v1960, %v1999
        %v2001 = vpop.f32.mrf.mxu0
        %v2002 = vpop.f32.mrf.mxu0
        %v2003 = vpop.f32.mrf.mxu0
        %2004 = vdwg.mxu0
        %2005 = vmatprep.subr.bf16.mxu0 0
        %2006 = vmatpush1.bf16.msra.mxu0 %v1588
        %2007 = vmatprep.subr.bf16.mxu0 0
        %2008 = vmatpush1.bf16.msra.mxu0 %v1587
        %2009 = vmatprep.subr.bf16.mxu0 0
        %2010 = vmatpush1.bf16.msra.mxu0 %v1586
        %2011 = vmatprep.subr.bf16.mxu0 0
        %2012 = vmatpush1.bf16.msra.mxu0 %v1585
        %2013 = vmatprep.subr.bf16.mxu0 0
        %2014 = vmatpush1.bf16.msra.mxu0 %v1584
        %2015 = vmatprep.subr.bf16.mxu0 0
        %2016 = vmatpush1.bf16.msra.mxu0 %v1583
        %2017 = vmatprep.subr.bf16.mxu0 0
        %2018 = vmatpush1.bf16.msra.mxu0 %v1582
        %2019 = vmatprep.subr.bf16.mxu0 0
        %2020 = vmatpush1.bf16.msra.mxu0 %v1581
        %2021 = vmatprep.subr.bf16.mxu0 0
        %2022 = vmatpush2.bf16.msra.mxu0 %v1596
        %2023 = vmatprep.subr.bf16.mxu0 0
        %2024 = vmatpush2.bf16.msra.mxu0 %v1595
        %2025 = vmatprep.subr.bf16.mxu0 0
        %2026 = vmatpush2.bf16.msra.mxu0 %v1594
        %2027 = vmatprep.subr.bf16.mxu0 0
        %2028 = vmatpush2.bf16.msra.mxu0 %v1593
        %2029 = vmatprep.subr.bf16.mxu0 0
        %2030 = vmatpush2.bf16.msra.mxu0 %v1592
        %2031 = vmatprep.subr.bf16.mxu0 0
        %2032 = vmatpush2.bf16.msra.mxu0 %v1591
        %2033 = vmatprep.subr.bf16.mxu0 0
        %2034 = vmatpush2.bf16.msra.mxu0 %v1590
        %2035 = vmatprep.subr.bf16.mxu0 0
        %2036 = vmatpush2.bf16.msra.mxu0 %v1589
        %2037 = vmatprep.mubr.bf16.mxu0 %v710
        %2038 = vmatmul.mubr.bf16.gmra.mxu0 %v708
        %v2039 = vpop.f32.mrf.mxu0
        %v2040 = vadd.f32 %v2000, %v2039
        %v2041 = vpop.f32.mrf.mxu0
        %v2042 = vpop.f32.mrf.mxu0
        %v2043 = vpop.f32.mrf.mxu0
        %2044 = vdwg.mxu0
        %2045 = vmatprep.subr.bf16.mxu0 0
        %2046 = vmatpush1.bf16.msra.mxu0 %v1604
        %2047 = vmatprep.subr.bf16.mxu0 0
        %2048 = vmatpush1.bf16.msra.mxu0 %v1603
        %2049 = vmatprep.subr.bf16.mxu0 0
        %2050 = vmatpush1.bf16.msra.mxu0 %v1602
        %2051 = vmatprep.subr.bf16.mxu0 0
        %2052 = vmatpush1.bf16.msra.mxu0 %v1601
        %2053 = vmatprep.subr.bf16.mxu0 0
        %2054 = vmatpush1.bf16.msra.mxu0 %v1600
        %2055 = vmatprep.subr.bf16.mxu0 0
        %2056 = vmatpush1.bf16.msra.mxu0 %v1599
        %2057 = vmatprep.subr.bf16.mxu0 0
        %2058 = vmatpush1.bf16.msra.mxu0 %v1598
        %2059 = vmatprep.subr.bf16.mxu0 0
        %2060 = vmatpush1.bf16.msra.mxu0 %v1597
        %2061 = vmatprep.subr.bf16.mxu0 0
        %2062 = vmatpush2.bf16.msra.mxu0 %v1612
        %2063 = vmatprep.subr.bf16.mxu0 0
        %2064 = vmatpush2.bf16.msra.mxu0 %v1611
        %2065 = vmatprep.subr.bf16.mxu0 0
        %2066 = vmatpush2.bf16.msra.mxu0 %v1610
        %2067 = vmatprep.subr.bf16.mxu0 0
        %2068 = vmatpush2.bf16.msra.mxu0 %v1609
        %2069 = vmatprep.subr.bf16.mxu0 0
        %2070 = vmatpush2.bf16.msra.mxu0 %v1608
        %2071 = vmatprep.subr.bf16.mxu0 0
        %2072 = vmatpush2.bf16.msra.mxu0 %v1607
        %2073 = vmatprep.subr.bf16.mxu0 0
        %2074 = vmatpush2.bf16.msra.mxu0 %v1606
        %2075 = vmatprep.subr.bf16.mxu0 0
        %2076 = vmatpush2.bf16.msra.mxu0 %v1605
        %2077 = vmatprep.mubr.bf16.mxu0 %v748
        %2078 = vmatmul.mubr.bf16.gmra.mxu0 %v734
        %v2079 = vpop.f32.mrf.mxu0
        %v2080 = vadd.f32 %v2040, %v2079
        %v2081 = vpop.f32.mrf.mxu0
        %v2082 = vpop.f32.mrf.mxu0
        %v2083 = vpop.f32.mrf.mxu0
        %2084 = vdwg.mxu0
        %2085 = vmatprep.subr.bf16.mxu0 0
        %2086 = vmatpush1.bf16.msra.mxu0 %v1620
        %2087 = vmatprep.subr.bf16.mxu0 0
        %2088 = vmatpush1.bf16.msra.mxu0 %v1619
        %2089 = vmatprep.subr.bf16.mxu0 0
        %2090 = vmatpush1.bf16.msra.mxu0 %v1618
        %2091 = vmatprep.subr.bf16.mxu0 0
        %2092 = vmatpush1.bf16.msra.mxu0 %v1617
        %2093 = vmatprep.subr.bf16.mxu0 0
        %2094 = vmatpush1.bf16.msra.mxu0 %v1616
        %2095 = vmatprep.subr.bf16.mxu0 0
        %2096 = vmatpush1.bf16.msra.mxu0 %v1615
        %2097 = vmatprep.subr.bf16.mxu0 0
        %2098 = vmatpush1.bf16.msra.mxu0 %v1614
        %2099 = vmatprep.subr.bf16.mxu0 0
        %2100 = vmatpush1.bf16.msra.mxu0 %v1613
        %2101 = vmatprep.subr.bf16.mxu0 0
        %2102 = vmatpush2.bf16.msra.mxu0 %v1628
        %2103 = vmatprep.subr.bf16.mxu0 0
        %2104 = vmatpush2.bf16.msra.mxu0 %v1627
        %2105 = vmatprep.subr.bf16.mxu0 0
        %2106 = vmatpush2.bf16.msra.mxu0 %v1626
        %2107 = vmatprep.subr.bf16.mxu0 0
        %2108 = vmatpush2.bf16.msra.mxu0 %v1625
        %2109 = vmatprep.subr.bf16.mxu0 0
        %2110 = vmatpush2.bf16.msra.mxu0 %v1624
        %2111 = vmatprep.subr.bf16.mxu0 0
        %2112 = vmatpush2.bf16.msra.mxu0 %v1623
        %2113 = vmatprep.subr.bf16.mxu0 0
        %2114 = vmatpush2.bf16.msra.mxu0 %v1622
        %2115 = vmatprep.subr.bf16.mxu0 0
        %2116 = vmatpush2.bf16.msra.mxu0 %v1621
        %2117 = vmatprep.mubr.bf16.mxu0 %v758
        %2118 = vmatmul.mubr.bf16.gmra.mxu0 %v756
        %v2119 = vpop.f32.mrf.mxu0
        %v2120 = vadd.f32 %v2080, %v2119
        %v2121 = vpop.f32.mrf.mxu0
        %v2122 = vpop.f32.mrf.mxu0
        %v2123 = vpop.f32.mrf.mxu0
        %2124 = vdwg.mxu0
        %2125 = vmatprep.subr.bf16.mxu0 0
        %2126 = vmatpush1.bf16.msra.mxu0 %v1636
        %2127 = vmatprep.subr.bf16.mxu0 0
        %2128 = vmatpush1.bf16.msra.mxu0 %v1635
        %2129 = vmatprep.subr.bf16.mxu0 0
        %2130 = vmatpush1.bf16.msra.mxu0 %v1634
        %2131 = vmatprep.subr.bf16.mxu0 0
        %2132 = vmatpush1.bf16.msra.mxu0 %v1633
        %2133 = vmatprep.subr.bf16.mxu0 0
        %2134 = vmatpush1.bf16.msra.mxu0 %v1632
        %2135 = vmatprep.subr.bf16.mxu0 0
        %2136 = vmatpush1.bf16.msra.mxu0 %v1631
        %2137 = vmatprep.subr.bf16.mxu0 0
        %2138 = vmatpush1.bf16.msra.mxu0 %v1630
        %2139 = vmatprep.subr.bf16.mxu0 0
        %2140 = vmatpush1.bf16.msra.mxu0 %v1629
        %2141 = vmatprep.subr.bf16.mxu0 0
        %2142 = vmatpush2.bf16.msra.mxu0 %v1644
        %2143 = vmatprep.subr.bf16.mxu0 0
        %2144 = vmatpush2.bf16.msra.mxu0 %v1643
        %2145 = vmatprep.subr.bf16.mxu0 0
        %2146 = vmatpush2.bf16.msra.mxu0 %v1642
        %2147 = vmatprep.subr.bf16.mxu0 0
        %2148 = vmatpush2.bf16.msra.mxu0 %v1641
        %2149 = vmatprep.subr.bf16.mxu0 0
        %2150 = vmatpush2.bf16.msra.mxu0 %v1640
        %2151 = vmatprep.subr.bf16.mxu0 0
        %2152 = vmatpush2.bf16.msra.mxu0 %v1639
        %2153 = vmatprep.subr.bf16.mxu0 0
        %2154 = vmatpush2.bf16.msra.mxu0 %v1638
        %2155 = vmatprep.subr.bf16.mxu0 0
        %2156 = vmatpush2.bf16.msra.mxu0 %v1637
        %2157 = vmatprep.mubr.bf16.mxu0 %v755
        %2158 = vmatmul.mubr.bf16.gmra.mxu0 %v741
        %v2159 = vpop.f32.mrf.mxu0
        %v2160 = vadd.f32 %v2120, %v2159
        %v2161 = vpop.f32.mrf.mxu0
        %v2162 = vpop.f32.mrf.mxu0
        %v2163 = vpop.f32.mrf.mxu0
        %2164 = vdwg.mxu0
        %2165 = vmatprep.subr.bf16.mxu0 0
        %2166 = vmatpush1.bf16.msra.mxu0 %v1652
        %2167 = vmatprep.subr.bf16.mxu0 0
        %2168 = vmatpush1.bf16.msra.mxu0 %v1651
        %2169 = vmatprep.subr.bf16.mxu0 0
        %2170 = vmatpush1.bf16.msra.mxu0 %v1650
        %2171 = vmatprep.subr.bf16.mxu0 0
        %2172 = vmatpush1.bf16.msra.mxu0 %v1649
        %2173 = vmatprep.subr.bf16.mxu0 0
        %2174 = vmatpush1.bf16.msra.mxu0 %v1648
        %2175 = vmatprep.subr.bf16.mxu0 0
        %2176 = vmatpush1.bf16.msra.mxu0 %v1647
        %2177 = vmatprep.subr.bf16.mxu0 0
        %2178 = vmatpush1.bf16.msra.mxu0 %v1646
        %2179 = vmatprep.subr.bf16.mxu0 0
        %2180 = vmatpush1.bf16.msra.mxu0 %v1645
        %2181 = vmatprep.subr.bf16.mxu0 0
        %2182 = vmatpush2.bf16.msra.mxu0 %v1660
        %2183 = vmatprep.subr.bf16.mxu0 0
        %2184 = vmatpush2.bf16.msra.mxu0 %v1659
        %2185 = vmatprep.subr.bf16.mxu0 0
        %2186 = vmatpush2.bf16.msra.mxu0 %v1658
        %2187 = vmatprep.subr.bf16.mxu0 0
        %2188 = vmatpush2.bf16.msra.mxu0 %v1657
        %2189 = vmatprep.subr.bf16.mxu0 0
        %2190 = vmatpush2.bf16.msra.mxu0 %v1656
        %2191 = vmatprep.subr.bf16.mxu0 0
        %2192 = vmatpush2.bf16.msra.mxu0 %v1655
        %2193 = vmatprep.subr.bf16.mxu0 0
        %2194 = vmatpush2.bf16.msra.mxu0 %v1654
        %2195 = vmatprep.subr.bf16.mxu0 0
        %2196 = vmatpush2.bf16.msra.mxu0 %v1653
        %2197 = vmatprep.mubr.bf16.mxu0 %v759
        %2198 = vmatmul.mubr.bf16.gmra.mxu0 %v757
        %v2199 = vpop.f32.mrf.mxu0
        %v2200 = vadd.f32 %v2160, %v2199
        %v2201 = vpop.f32.mrf.mxu0
        %v2202 = vpop.f32.mrf.mxu0
        %v2203 = vpop.f32.mrf.mxu0
        %2204 = vdwg.mxu0
        %2205 = vmatprep.subr.bf16.mxu0 0
        %2206 = vmatpush1.bf16.msra.mxu0 %v1668
        %2207 = vmatprep.subr.bf16.mxu0 0
        %2208 = vmatpush1.bf16.msra.mxu0 %v1667
        %2209 = vmatprep.subr.bf16.mxu0 0
        %2210 = vmatpush1.bf16.msra.mxu0 %v1666
        %2211 = vmatprep.subr.bf16.mxu0 0
        %2212 = vmatpush1.bf16.msra.mxu0 %v1665
        %2213 = vmatprep.subr.bf16.mxu0 0
        %2214 = vmatpush1.bf16.msra.mxu0 %v1664
        %2215 = vmatprep.subr.bf16.mxu0 0
        %2216 = vmatpush1.bf16.msra.mxu0 %v1663
        %2217 = vmatprep.subr.bf16.mxu0 0
        %2218 = vmatpush1.bf16.msra.mxu0 %v1662
        %2219 = vmatprep.subr.bf16.mxu0 0
        %2220 = vmatpush1.bf16.msra.mxu0 %v1661
        %2221 = vmatprep.subr.bf16.mxu0 0
        %2222 = vmatpush2.bf16.msra.mxu0 %v1676
        %2223 = vmatprep.subr.bf16.mxu0 0
        %2224 = vmatpush2.bf16.msra.mxu0 %v1675
        %2225 = vmatprep.subr.bf16.mxu0 0
        %2226 = vmatpush2.bf16.msra.mxu0 %v1674
        %2227 = vmatprep.subr.bf16.mxu0 0
        %2228 = vmatpush2.bf16.msra.mxu0 %v1673
        %2229 = vmatprep.subr.bf16.mxu0 0
        %2230 = vmatpush2.bf16.msra.mxu0 %v1672
        %2231 = vmatprep.subr.bf16.mxu0 0
        %2232 = vmatpush2.bf16.msra.mxu0 %v1671
        %2233 = vmatprep.subr.bf16.mxu0 0
        %2234 = vmatpush2.bf16.msra.mxu0 %v1670
        %2235 = vmatprep.subr.bf16.mxu0 0
        %2236 = vmatpush2.bf16.msra.mxu0 %v1669
        %2237 = vmatprep.mubr.bf16.mxu0 %v797
        %2238 = vmatmul.mubr.bf16.gmra.mxu0 %v783
        %v2239 = vpop.f32.mrf.mxu0
        %v2240 = vadd.f32 %v2200, %v2239
        %v2241 = vpop.f32.mrf.mxu0
        %v2242 = vpop.f32.mrf.mxu0
        %v2243 = vpop.f32.mrf.mxu0
        %2244 = vdwg.mxu0
        %2245 = vmatprep.subr.bf16.mxu0 0
        %2246 = vmatpush1.bf16.msra.mxu0 %v1684
        %2247 = vmatprep.subr.bf16.mxu0 0
        %2248 = vmatpush1.bf16.msra.mxu0 %v1683
        %2249 = vmatprep.subr.bf16.mxu0 0
        %2250 = vmatpush1.bf16.msra.mxu0 %v1682
        %2251 = vmatprep.subr.bf16.mxu0 0
        %2252 = vmatpush1.bf16.msra.mxu0 %v1681
        %2253 = vmatprep.subr.bf16.mxu0 0
        %2254 = vmatpush1.bf16.msra.mxu0 %v1680
        %2255 = vmatprep.subr.bf16.mxu0 0
        %2256 = vmatpush1.bf16.msra.mxu0 %v1679
        %2257 = vmatprep.subr.bf16.mxu0 0
        %2258 = vmatpush1.bf16.msra.mxu0 %v1678
        %2259 = vmatprep.subr.bf16.mxu0 0
        %2260 = vmatpush1.bf16.msra.mxu0 %v1677
        %2261 = vmatprep.subr.bf16.mxu0 0
        %2262 = vmatpush2.bf16.msra.mxu0 %v1692
        %2263 = vmatprep.subr.bf16.mxu0 0
        %2264 = vmatpush2.bf16.msra.mxu0 %v1691
        %2265 = vmatprep.subr.bf16.mxu0 0
        %2266 = vmatpush2.bf16.msra.mxu0 %v1690
        %2267 = vmatprep.subr.bf16.mxu0 0
        %2268 = vmatpush2.bf16.msra.mxu0 %v1689
        %2269 = vmatprep.subr.bf16.mxu0 0
        %2270 = vmatpush2.bf16.msra.mxu0 %v1688
        %2271 = vmatprep.subr.bf16.mxu0 0
        %2272 = vmatpush2.bf16.msra.mxu0 %v1687
        %2273 = vmatprep.subr.bf16.mxu0 0
        %2274 = vmatpush2.bf16.msra.mxu0 %v1686
        %2275 = vmatprep.subr.bf16.mxu0 0
        %2276 = vmatpush2.bf16.msra.mxu0 %v1685
        %2277 = vmatprep.mubr.bf16.mxu0 %v806
        %2278 = vmatmul.mubr.bf16.gmra.mxu0 %v805
        %v2279 = vpop.f32.mrf.mxu0
        %v2280 = vadd.f32 %v2240, %v2279
        %v2281 = vpop.f32.mrf.mxu0
        %v2282 = vpop.f32.mrf.mxu0
        %v2283 = vpop.f32.mrf.mxu0
        %2284 = vdwg.mxu0
        %2285 = vmatprep.subr.bf16.mxu0 0
        %2286 = vmatpush1.bf16.msra.mxu0 %v1700
        %2287 = vmatprep.subr.bf16.mxu0 0
        %2288 = vmatpush1.bf16.msra.mxu0 %v1699
        %2289 = vmatprep.subr.bf16.mxu0 0
        %2290 = vmatpush1.bf16.msra.mxu0 %v1698
        %2291 = vmatprep.subr.bf16.mxu0 0
        %2292 = vmatpush1.bf16.msra.mxu0 %v1697
        %2293 = vmatprep.subr.bf16.mxu0 0
        %2294 = vmatpush1.bf16.msra.mxu0 %v1696
        %2295 = vmatprep.subr.bf16.mxu0 0
        %2296 = vmatpush1.bf16.msra.mxu0 %v1695
        %2297 = vmatprep.subr.bf16.mxu0 0
        %2298 = vmatpush1.bf16.msra.mxu0 %v1694
        %2299 = vmatprep.subr.bf16.mxu0 0
        %2300 = vmatpush1.bf16.msra.mxu0 %v1693
        %2301 = vmatprep.subr.bf16.mxu0 0
        %2302 = vmatpush2.bf16.msra.mxu0 %v1708
        %2303 = vmatprep.subr.bf16.mxu0 0
        %2304 = vmatpush2.bf16.msra.mxu0 %v1707
        %2305 = vmatprep.subr.bf16.mxu0 0
        %2306 = vmatpush2.bf16.msra.mxu0 %v1706
        %2307 = vmatprep.subr.bf16.mxu0 0
        %2308 = vmatpush2.bf16.msra.mxu0 %v1705
        %2309 = vmatprep.subr.bf16.mxu0 0
        %2310 = vmatpush2.bf16.msra.mxu0 %v1704
        %2311 = vmatprep.subr.bf16.mxu0 0
        %2312 = vmatpush2.bf16.msra.mxu0 %v1703
        %2313 = vmatprep.subr.bf16.mxu0 0
        %2314 = vmatpush2.bf16.msra.mxu0 %v1702
        %2315 = vmatprep.subr.bf16.mxu0 0
        %2316 = vmatpush2.bf16.msra.mxu0 %v1701
        %2317 = vmatprep.mubr.bf16.mxu0 %v804
        %2318 = vmatmul.mubr.bf16.gmra.mxu0 %v790
        %v2319 = vpop.f32.mrf.mxu0
        %v2320 = vadd.f32 %v2280, %v2319
        %v2321 = vpop.f32.mrf.mxu0
        %v2322 = vpop.f32.mrf.mxu0
        %v2323 = vpop.f32.mrf.mxu0
        %2324 = vdwg.mxu0
        %v2325 = vadd.f32 %v303, %v2320
        %2326 = vst [vmem:[#allocation2] sm:$0x3] %v2325
        %p2327 = scmp.eq.s32.totalorder %s21, 3
        // Predicated region
        $region61: #{tcn_forward.3} parent=39 // pred_check
          %p2328 = pneg %p2327
        $region62: #{tcn_forward.3} parent=39 // pred_check_branch
          %2330 = sbr.rel (%p2328) target = $region64
        $region63: #{tcn_forward.3} parent=39 // pred_region
          %v2331 = vld [vmem:[#allocation2] sm:$0x3]
          %v2332 = vld [vmem:[#allocation7] sm:$0xff]
          %v2333 = vld [vmem:[#allocation7 + $0x8] sm:$0xff]
          %v2334 = vld [vmem:[#allocation7 + $0x10] sm:$0xff]
          %v2335 = vld [vmem:[#allocation7 + $0x18] sm:$0xff]
          %v2336 = vld [vmem:[#allocation7 + $0x20] sm:$0xff]
          %v2337 = vld [vmem:[#allocation7 + $0x28] sm:$0xff]
          %v2338 = vld [vmem:[#allocation7 + $0x30] sm:$0xff]
          %v2339 = vld [vmem:[#allocation7 + $0x38] sm:$0xff]
          %v2340 = vld [vmem:[#allocation7 + $0x40] sm:$0xff]
          %v2341 = vld [vmem:[#allocation7 + $0x48] sm:$0xff]
          %v2342 = vld [vmem:[#allocation7 + $0x50] sm:$0xff]
          %v2343 = vld [vmem:[#allocation7 + $0x58] sm:$0xff]
          %v2344 = vld [vmem:[#allocation7 + $0x60] sm:$0xff]
          %v2345 = vld [vmem:[#allocation7 + $0x68] sm:$0xff]
          %v2346 = vld [vmem:[#allocation7 + $0x70] sm:$0xff]
          %v2347 = vld [vmem:[#allocation7 + $0x78] sm:$0xff]
          %v2348 = vld [vmem:[#allocation8] sm:$0x1]
          %v2350 = vlaneseq
          %v2351 = vshrl.u32 %v2350, 7
          %v2352 = vsub.s32 0, %v2351
          %v2353 = vrot.slane %v2348, %v2352
          %2355 = vmatprep.subr.mxu0 0.0
          %2356 = vmatpush1.msra.mxu0 %v2347
          %2357 = vmatprep.subr.mxu0 0.0
          %2358 = vmatpush1.msra.mxu0 %v2346
          %2359 = vmatprep.subr.mxu0 0.0
          %2360 = vmatpush1.msra.mxu0 %v2345
          %2361 = vmatprep.subr.mxu0 0.0
          %2362 = vmatpush1.msra.mxu0 %v2344
          %2363 = vmatprep.subr.mxu0 0.0
          %2364 = vmatpush1.msra.mxu0 %v2343
          %2365 = vmatprep.subr.mxu0 0.0
          %2366 = vmatpush1.msra.mxu0 %v2342
          %2367 = vmatprep.subr.mxu0 0.0
          %2368 = vmatpush1.msra.mxu0 %v2341
          %2369 = vmatprep.subr.mxu0 0.0
          %2370 = vmatpush1.msra.mxu0 %v2340
          %2371 = vmatprep.subr.mxu0 0.0
          %2372 = vmatpush1.msra.mxu0 %v2339
          %2373 = vmatprep.subr.mxu0 0.0
          %2374 = vmatpush1.msra.mxu0 %v2338
          %2375 = vmatprep.subr.mxu0 0.0
          %2376 = vmatpush1.msra.mxu0 %v2337
          %2377 = vmatprep.subr.mxu0 0.0
          %2378 = vmatpush1.msra.mxu0 %v2336
          %2379 = vmatprep.subr.mxu0 0.0
          %2380 = vmatpush1.msra.mxu0 %v2335
          %2381 = vmatprep.subr.mxu0 0.0
          %2382 = vmatpush1.msra.mxu0 %v2334
          %2383 = vmatprep.subr.mxu0 0.0
          %2384 = vmatpush1.msra.mxu0 %v2333
          %2385 = vmatprep.subr.mxu0 0.0
          %2386 = vmatpush1.msra.mxu0 %v2332
          %2387 = vmatprep.subr.mxu0 0.0
          %2388 = vmatpush2.msra.mxu0 0.0
          %2389 = vmatprep.subr.mxu0 0.0
          %2390 = vmatpush2.msra.mxu0 0.0
          %2391 = vmatprep.subr.mxu0 0.0
          %2392 = vmatpush2.msra.mxu0 0.0
          %2393 = vmatprep.subr.mxu0 0.0
          %2394 = vmatpush2.msra.mxu0 0.0
          %2395 = vmatprep.subr.mxu0 0.0
          %2396 = vmatpush2.msra.mxu0 0.0
          %2397 = vmatprep.subr.mxu0 0.0
          %2398 = vmatpush2.msra.mxu0 0.0
          %2399 = vmatprep.subr.mxu0 0.0
          %2400 = vmatpush2.msra.mxu0 0.0
          %2401 = vmatprep.subr.mxu0 0.0
          %2402 = vmatpush2.msra.mxu0 0.0
          %2403 = vmatprep.subr.mxu0 0.0
          %2404 = vmatpush2.msra.mxu0 0.0
          %2405 = vmatprep.subr.mxu0 0.0
          %2406 = vmatpush2.msra.mxu0 0.0
          %2407 = vmatprep.subr.mxu0 0.0
          %2408 = vmatpush2.msra.mxu0 0.0
          %2409 = vmatprep.subr.mxu0 0.0
          %2410 = vmatpush2.msra.mxu0 0.0
          %2411 = vmatprep.subr.mxu0 0.0
          %2412 = vmatpush2.msra.mxu0 0.0
          %2413 = vmatprep.subr.mxu0 0.0
          %2414 = vmatpush2.msra.mxu0 0.0
          %2415 = vmatprep.subr.mxu0 0.0
          %2416 = vmatpush2.msra.mxu0 0.0
          %2417 = vmatprep.subr.mxu0 0.0
          %2418 = vmatpush2.msra.mxu0 0.0
          %2419 = vmatprep.mubr.f32.mxu0 0.0
          %2420 = vmatmul.mubr.f32.gmra.mxu0 %v2331
          %v2421 = vpop.f32.mrf.mxu0
          %v2422 = vadd.f32 %v2353, %v2421
          %v2423 = vpop.f32.mrf.mxu0
          %2424 = vdwg.mxu0
          %2425 = vst [vmem:[%s5] sm:$0x3] %v2422
        $region64: #{tcn_forward.3} parent=39 // pred_fallthru
          _
        // Predicated region
        $region65: #{tcn_forward.3} parent=39 // pred_check
          %p2426 = pneg %p149
        $region66: #{tcn_forward.3} parent=39 // pred_check_branch
          %2428 = sbr.rel (%p2426) target = $region68
        $region67: #{tcn_forward.3} parent=39 // pred_region
          _
        $region68: #{tcn_forward.3} parent=39 // pred_fallthru
          _
        // Predicated region
        $region69: #{tcn_forward.3} parent=39 // pred_check
          %p2429 = pneg %p149
        $region70: #{tcn_forward.3} parent=39 // pred_check_branch
          %2431 = sbr.rel (%p2429) target = $region72
        $region71: #{tcn_forward.3} parent=39 // pred_region
          _
        $region72: #{tcn_forward.3} parent=39 // pred_fallthru
          _
      $region40: #{tcn_forward.3} parent=5 // pred_fallthru
        _
      %p2432 = scmp.le.s32.totalorder 2, %s16
      // Predicated region
      $region73: #{tcn_forward.3} parent=5 // pred_check
        %p2433 = pneg %p2432
      $region74: #{tcn_forward.3} parent=5 // pred_check_branch
        %2435 = sbr.rel (%p2433) target = $region76
      $region75: #{tcn_forward.3} parent=5 // pred_region
        %s2436 = ssub.s32 %s16, 2
      $region76: #{tcn_forward.3} parent=5 // pred_fallthru
        _
    $region6: #{tcn_forward.3} parent=1 // loop_footer
      %s20 = sadd.s32 1, %s16
    $region7: #{tcn_forward.3} parent=1 // loop_footer_branch
      %15 = sbr.rel target = $region3
    $region8: #{tcn_forward.3} parent=1 // loop_exit
      _
    %2437 = vsyncpa [#allocation4], 1
    %s2438 = scalar_lea.sflag [#allocation4], 1
    %2439 = vsyncpa %s2438, 1
    %2440 = vsyncpa [#allocation6], 1
    %2441 = vsyncpa [#allocation9], 1

</llo_original>
